<compile_context>
chip_gen: v7x
topology: tpu7x:2x2x1
jax: 0.10.0
libtpu: 0.0.40
codegen_flags: <defaults>
</compile_context>

<pallas_src>
import math

import jax
import jax.numpy as jnp
from jax import lax
from jax.experimental import pallas as pl
from jax.experimental.pallas import tpu as pltpu

# ---- small deterministic model dims (consistent with the module's forward) ----
B, S, I = 2, 8, 16                  # batch, sequence length, input_size
H, NH, FF, LAYERS = 32, 4, 64, 2    # hidden_size, nhead, dim_feedforward, num_layers
HD = H // NH
BS = B * S
NBS = NH * BS                       # head-stacked row count = 64
EPS = 1e-5                          # nn.LayerNorm default


def _layernorm(x, gamma, beta):
    mean = jnp.mean(x, axis=-1, keepdims=True)
    var = jnp.mean((x - mean) ** 2, axis=-1, keepdims=True)
    return (x - mean) * lax.rsqrt(var + EPS) * gamma + beta


# ---------------- single fused kernel: the whole forward pass ----------------
def fused_kernel(x_ref, fcw_ref, peb_ref, mask_ref,
                 wqkv_ref, wo_ref, w1_ref, w2_ref, vec_ref, lnf_ref, o_ref):
    f32 = jnp.float32
    bf16 = jnp.bfloat16

    # src_fc + positional encoding (pe_b already holds tile(pe, B) + fc bias)
    x = jnp.dot(x_ref[...].astype(bf16), fcw_ref[...],
                preferred_element_type=f32) + peb_ref[...]          # (BS, H) f32

    mask = mask_ref[...]                                            # (NBS, NBS) f32

    # TODO(synk): all dropouts (PE + encoder-layer) treated as identity (eval mode).
    for l in range(LAYERS):                    # static unroll over layers
        wqkv = wqkv_ref[l]                     # (H, 3H) bf16, Q cols pre-scaled
        wo = wo_ref[l]                         # (H, H)  bf16
        w1 = w1_ref[l]                         # (H, FF) bf16
        w2 = w2_ref[l]                         # (FF, H) bf16
        vec = vec_ref[l]                       # (8, 128) f32, one vector per row
        bqkv = vec[0:1, 0:3 * H]
        bo = vec[1:2, 0:H]
        b1 = vec[2:3, 0:FF]
        b2 = vec[3:4, 0:H]
        g1 = vec[4:5, 0:H]
        be1 = vec[5:6, 0:H]
        g2 = vec[6:7, 0:H]
        be2 = vec[7:8, 0:H]

        # QKV projection once for all rows (Q part already scaled by 1/sqrt(HD))
        qkv = jnp.dot(x.astype(bf16), wqkv,
                      preferred_element_type=f32) + bqkv            # (BS, 3H) f32

        # head-stack along sublanes: row n*BS + (b*S + s)  ->  (NBS, HD)
        q_r = jnp.concatenate(
            [qkv[:, n * HD:(n + 1) * HD] for n in range(NH)], axis=0)
        k_r = jnp.concatenate(
            [qkv[:, H + n * HD: H + (n + 1) * HD] for n in range(NH)], axis=0)
        v_r = jnp.concatenate(
            [qkv[:, 2 * H + n * HD: 2 * H + (n + 1) * HD] for n in range(NH)], axis=0)

        # one score matmul for all heads & batches; mask kills cross-block terms
        s = lax.dot_general(q_r.astype(bf16), k_r.astype(bf16),
                            (((1,), (1,)), ((), ())),
                            preferred_element_type=f32) + mask      # (NBS, NBS)
        s = s - jnp.max(s, axis=-1, keepdims=True)
        p = jnp.exp(s)
        p = p * pl.reciprocal(jnp.sum(p, axis=-1, keepdims=True), approx=True)
        o_r = jnp.dot(p.astype(bf16), v_r.astype(bf16),
                      preferred_element_type=f32)                   # (NBS, HD)

        # un-stack heads back to lanes -> (BS, H), then single output projection
        attn = jnp.concatenate(
            [o_r[n * BS:(n + 1) * BS, :] for n in range(NH)], axis=1)
        attn = jnp.dot(attn.astype(bf16), wo,
                       preferred_element_type=f32) + bo             # (BS, H)

        src = _layernorm(x + attn, g1, be1)
        h1 = jnp.maximum(
            jnp.dot(src.astype(bf16), w1, preferred_element_type=f32) + b1, 0.0)
        h2 = jnp.dot(h1.astype(bf16), w2, preferred_element_type=f32) + b2
        x = _layernorm(src + h2, g2, be2)

    lnf = lnf_ref[...]                         # (2, H): row0 gamma, row1 beta
    o_ref[...] = _layernorm(x, lnf[0:1, :], lnf[1:2, :])


# ---------------- wrapper: one pallas_call, no grid, all-VMEM operands ----------------
def transformer_encoder(src, packed):
    src2d = src.reshape(BS, I)
    vspec = pl.BlockSpec(memory_space=pltpu.MemorySpace.VMEM)
    out2d = pl.pallas_call(
        fused_kernel,
        out_shape=jax.ShapeDtypeStruct((BS, H), jnp.float32),
        in_specs=[vspec] * 10,
        out_specs=vspec,
    )(src2d, packed['fc_w'], packed['pe_b'], packed['mask'],
      packed['wqkv'], packed['wo'], packed['w1'], packed['w2'],
      packed['vec'], packed['lnf'])
    return out2d.reshape(B, S, H)


# ---------------- deterministic parameter / PE construction ----------------
def make_pe(seq, dim):
    pos = jnp.arange(seq, dtype=jnp.float32)[:, None]
    div = jnp.exp(jnp.arange(0, dim, 2, dtype=jnp.float32) * (-math.log(10000.0) / dim))
    pe = jnp.zeros((seq, dim), jnp.float32)
    pe = pe.at[:, 0::2].set(jnp.sin(pos * div))
    pe = pe.at[:, 1::2].set(jnp.cos(pos * div))
    return pe


def init_params(key):
    ks = jax.random.split(key, 2 + LAYERS)
    rnd = lambda k, shp, s=0.05: jax.random.normal(k, shp, jnp.float32) * s
    params = {
        'fc_w': rnd(ks[0], (I, H)),        # stored pre-transposed: x @ W
        'fc_b': rnd(ks[1], (1, H)),
        'ln_f_g': jnp.ones((1, H), jnp.float32),
        'ln_f_b': jnp.zeros((1, H), jnp.float32),
        'layers': [],
    }
    for l in range(LAYERS):
        lk = jax.random.split(ks[2 + l], 8)
        params['layers'].append({
            'wqkv': rnd(lk[0], (H, 3 * H)),   # in_proj_weight.T
            'bqkv': rnd(lk[1], (1, 3 * H)),
            'wo':   rnd(lk[2], (H, H)),       # out_proj.weight.T
            'bo':   rnd(lk[3], (1, H)),
            'w1':   rnd(lk[4], (H, FF)),      # linear1.weight.T
            'b1':   rnd(lk[5], (1, FF)),
            'w2':   rnd(lk[6], (FF, H)),      # linear2.weight.T
            'b2':   rnd(lk[7], (1, H)),
            'g1': jnp.ones((1, H), jnp.float32), 'be1': jnp.zeros((1, H), jnp.float32),
            'g2': jnp.ones((1, H), jnp.float32), 'be2': jnp.zeros((1, H), jnp.float32),
        })
    return params


def pack_params(params, pe):
    """One-time packing: lane-aligned slabs, bf16 weights, scale+mask folded in."""
    scale = 1.0 / math.sqrt(HD)
    pe_b = jnp.tile(pe, (B, 1)) + params['fc_b']                     # (BS, H) f32

    wqkv_l, wo_l, w1_l, w2_l, vec_l = [], [], [], [], []
    for lp in params['layers']:
        # fold 1/sqrt(HD) into the Q third of the projection (weights + bias)
        wqkv = lp['wqkv'].at[:, :H].multiply(scale)
        bqkv = lp['bqkv'].at[:, :H].multiply(scale)
        wqkv_l.append(wqkv)
        wo_l.append(lp['wo'])
        w1_l.append(lp['w1'])
        w2_l.append(lp['w2'])
        vec = jnp.zeros((8, 128), jnp.float32)
        vec = vec.at[0, :3 * H].set(bqkv[0])
        vec = vec.at[1, :H].set(lp['bo'][0])
        vec = vec.at[2, :FF].set(lp['b1'][0])
        vec = vec.at[3, :H].set(lp['b2'][0])
        vec = vec.at[4, :H].set(lp['g1'][0])
        vec = vec.at[5, :H].set(lp['be1'][0])
        vec = vec.at[6, :H].set(lp['g2'][0])
        vec = vec.at[7, :H].set(lp['be2'][0])
        vec_l.append(vec)

    # block-diagonal additive mask over head-stacked rows (same head AND batch)
    idx = jnp.arange(NBS) // S
    mask = jnp.where(idx[:, None] == idx[None, :], 0.0, -1e30).astype(jnp.float32)

    lnf = jnp.concatenate([params['ln_f_g'], params['ln_f_b']], axis=0)  # (2, H)
    return {
        'fc_w': params['fc_w'].astype(jnp.bfloat16),              # (I, H)
        'pe_b': pe_b,                                              # (BS, H) f32
        'mask': mask,                                              # (NBS, NBS) f32
        'wqkv': jnp.stack(wqkv_l).astype(jnp.bfloat16),            # (L, H, 3H)
        'wo':   jnp.stack(wo_l).astype(jnp.bfloat16),              # (L, H, H)
        'w1':   jnp.stack(w1_l).astype(jnp.bfloat16),              # (L, H, FF)
        'w2':   jnp.stack(w2_l).astype(jnp.bfloat16),              # (L, FF, H)
        'vec':  jnp.stack(vec_l),                                  # (L, 8, 128) f32
        'lnf':  lnf,                                               # (2, H) f32
    }


# ---------------- pure-JAX reference (same math, f32) for a sanity check ----------------
def ref_forward(src, params, pe):
    x = src @ params['fc_w'] + params['fc_b'] + pe[None]
    for lp in params['layers']:
        qkv = x @ lp['wqkv'] + lp['bqkv']
        q, k, v = qkv[..., :H], qkv[..., H:2 * H], qkv[..., 2 * H:]
        q = q.reshape(B, S, NH, HD)
        k = k.reshape(B, S, NH, HD)
        v = v.reshape(B, S, NH, HD)
        s = jnp.einsum('bqhd,bkhd->bhqk', q, k) / math.sqrt(HD)
        p = jax.nn.softmax(s, axis=-1)
        o = jnp.einsum('bhqk,bkhd->bqhd', p, v).reshape(B, S, H)
        o = o @ lp['wo'] + lp['bo']
        x = _layernorm(x + o, lp['g1'], lp['be1'])
        ff = jnp.maximum(x @ lp['w1'] + lp['b1'], 0.0) @ lp['w2'] + lp['b2']
        x = _layernorm(x + ff, lp['g2'], lp['be2'])
    return _layernorm(x, params['ln_f_g'], params['ln_f_b'])


if __name__ == "__main__":
    key = jax.random.PRNGKey(0)
    kp, kx = jax.random.split(key)
    params = init_params(kp)
    src = jax.random.normal(kx, (B, S, I), jnp.float32)
    pe = make_pe(S, H)
    packed = pack_params(params, pe)

    out = transformer_encoder(src, packed)
    out = jax.block_until_ready(out)
    assert out.shape == (B, S, H), out.shape

    ref = ref_forward(src, params, pe)
    err = float(jnp.max(jnp.abs(out - ref)))
    if not jnp.allclose(out, ref, atol=2e-2, rtol=2e-2):
        raise AssertionError(f"Pallas output mismatch vs reference, max abs err = {err}")

    print("KERNEL_OK")
</pallas_src>

<mosaic_0001>
module attributes {stable_mosaic.version = 11 : i64} {
  func.func @fused_kernel(%arg0: memref<16x16xf32, #tpu.memory_space<vmem>>, %arg1: memref<16x32xbf16, #tpu.memory_space<vmem>>, %arg2: memref<16x32xf32, #tpu.memory_space<vmem>>, %arg3: memref<64x64xf32, #tpu.memory_space<vmem>>, %arg4: memref<2x32x96xbf16, #tpu.memory_space<vmem>>, %arg5: memref<2x32x32xbf16, #tpu.memory_space<vmem>>, %arg6: memref<2x32x64xbf16, #tpu.memory_space<vmem>>, %arg7: memref<2x64x32xbf16, #tpu.memory_space<vmem>>, %arg8: memref<2x8x128xf32, #tpu.memory_space<vmem>>, %arg9: memref<2x32xf32, #tpu.memory_space<vmem>>, %arg10: memref<16x32xf32, #tpu.memory_space<vmem>>) attributes {dimension_semantics = [], scalar_prefetch = 0 : i64, scratch_operands = 0 : i64, tpu.core_type = #tpu.core_type<tc>} {
    %c0 = arith.constant 0 : index
    %c0_0 = arith.constant 0 : index
    %0 = vector.load %arg0[%c0, %c0_0] : memref<16x16xf32, #tpu.memory_space<vmem>>, vector<16x16xf32>
    %1 = arith.truncf %0 : vector<16x16xf32> to vector<16x16xbf16>
    %c0_1 = arith.constant 0 : index
    %c0_2 = arith.constant 0 : index
    %2 = vector.load %arg1[%c0_1, %c0_2] : memref<16x32xbf16, #tpu.memory_space<vmem>>, vector<16x32xbf16>
    %cst = arith.constant dense<0.000000e+00> : vector<16x32xf32>
    %3 = tpu.matmul %1, %2, %cst {dimension_numbers = #tpu.dot_dimension_numbers<[1], [0], [0], [1], [0, 0, 1, 1], [], []>} : vector<16x16xbf16>, vector<16x32xbf16>, vector<16x32xf32> -> vector<16x32xf32>
    %c0_3 = arith.constant 0 : index
    %c0_4 = arith.constant 0 : index
    %4 = vector.load %arg2[%c0_3, %c0_4] : memref<16x32xf32, #tpu.memory_space<vmem>>, vector<16x32xf32>
    %5 = arith.addf %3, %4 : vector<16x32xf32>
    %c0_5 = arith.constant 0 : index
    %c0_6 = arith.constant 0 : index
    %6 = vector.load %arg3[%c0_5, %c0_6] : memref<64x64xf32, #tpu.memory_space<vmem>>, vector<64x64xf32>
    %c0_7 = arith.constant 0 : index
    %c0_8 = arith.constant 0 : index
    %c0_9 = arith.constant 0 : index
    %7 = vector.load %arg4[%c0_7, %c0_8, %c0_9] : memref<2x32x96xbf16, #tpu.memory_space<vmem>>, vector<1x32x96xbf16>
    %8 = vector.shape_cast %7 : vector<1x32x96xbf16> to vector<32x96xbf16>
    %c0_10 = arith.constant 0 : index
    %c0_11 = arith.constant 0 : index
    %c0_12 = arith.constant 0 : index
    %9 = vector.load %arg5[%c0_10, %c0_11, %c0_12] : memref<2x32x32xbf16, #tpu.memory_space<vmem>>, vector<1x32x32xbf16>
    %10 = vector.shape_cast %9 : vector<1x32x32xbf16> to vector<32x32xbf16>
    %c0_13 = arith.constant 0 : index
    %c0_14 = arith.constant 0 : index
    %c0_15 = arith.constant 0 : index
    %11 = vector.load %arg6[%c0_13, %c0_14, %c0_15] : memref<2x32x64xbf16, #tpu.memory_space<vmem>>, vector<1x32x64xbf16>
    %12 = vector.shape_cast %11 : vector<1x32x64xbf16> to vector<32x64xbf16>
    %c0_16 = arith.constant 0 : index
    %c0_17 = arith.constant 0 : index
    %c0_18 = arith.constant 0 : index
    %13 = vector.load %arg7[%c0_16, %c0_17, %c0_18] : memref<2x64x32xbf16, #tpu.memory_space<vmem>>, vector<1x64x32xbf16>
    %14 = vector.shape_cast %13 : vector<1x64x32xbf16> to vector<64x32xbf16>
    %c0_19 = arith.constant 0 : index
    %c0_20 = arith.constant 0 : index
    %c0_21 = arith.constant 0 : index
    %15 = vector.load %arg8[%c0_19, %c0_20, %c0_21] : memref<2x8x128xf32, #tpu.memory_space<vmem>>, vector<1x8x128xf32>
    %16 = vector.shape_cast %15 : vector<1x8x128xf32> to vector<8x128xf32>
    %17 = vector.extract_strided_slice %16 {offsets = [0, 0], sizes = [1, 96], strides = [1, 1]} : vector<8x128xf32> to vector<1x96xf32>
    %18 = vector.extract_strided_slice %16 {offsets = [1, 0], sizes = [1, 32], strides = [1, 1]} : vector<8x128xf32> to vector<1x32xf32>
    %19 = vector.extract_strided_slice %16 {offsets = [2, 0], sizes = [1, 64], strides = [1, 1]} : vector<8x128xf32> to vector<1x64xf32>
    %20 = vector.extract_strided_slice %16 {offsets = [3, 0], sizes = [1, 32], strides = [1, 1]} : vector<8x128xf32> to vector<1x32xf32>
    %21 = vector.extract_strided_slice %16 {offsets = [4, 0], sizes = [1, 32], strides = [1, 1]} : vector<8x128xf32> to vector<1x32xf32>
    %22 = vector.extract_strided_slice %16 {offsets = [5, 0], sizes = [1, 32], strides = [1, 1]} : vector<8x128xf32> to vector<1x32xf32>
    %23 = vector.extract_strided_slice %16 {offsets = [6, 0], sizes = [1, 32], strides = [1, 1]} : vector<8x128xf32> to vector<1x32xf32>
    %24 = vector.extract_strided_slice %16 {offsets = [7, 0], sizes = [1, 32], strides = [1, 1]} : vector<8x128xf32> to vector<1x32xf32>
    %25 = arith.truncf %5 : vector<16x32xf32> to vector<16x32xbf16>
    %cst_22 = arith.constant dense<0.000000e+00> : vector<16x96xf32>
    %26 = tpu.matmul %25, %8, %cst_22 {dimension_numbers = #tpu.dot_dimension_numbers<[1], [0], [0], [1], [0, 0, 1, 1], [], []>} : vector<16x32xbf16>, vector<32x96xbf16>, vector<16x96xf32> -> vector<16x96xf32>
    %27 = vector.broadcast %17 : vector<1x96xf32> to vector<16x96xf32>
    %28 = arith.addf %26, %27 : vector<16x96xf32>
    %29 = vector.extract_strided_slice %28 {offsets = [0, 0], sizes = [16, 8], strides = [1, 1]} : vector<16x96xf32> to vector<16x8xf32>
    %30 = vector.extract_strided_slice %28 {offsets = [0, 8], sizes = [16, 8], strides = [1, 1]} : vector<16x96xf32> to vector<16x8xf32>
    %31 = vector.extract_strided_slice %28 {offsets = [0, 16], sizes = [16, 8], strides = [1, 1]} : vector<16x96xf32> to vector<16x8xf32>
    %32 = vector.extract_strided_slice %28 {offsets = [0, 24], sizes = [16, 8], strides = [1, 1]} : vector<16x96xf32> to vector<16x8xf32>
    %33 = tpu.concatenate %29, %30, %31, %32 in 0 : vector<16x8xf32>, vector<16x8xf32>, vector<16x8xf32>, vector<16x8xf32> -> vector<64x8xf32>
    %34 = vector.extract_strided_slice %28 {offsets = [0, 32], sizes = [16, 8], strides = [1, 1]} : vector<16x96xf32> to vector<16x8xf32>
    %35 = vector.extract_strided_slice %28 {offsets = [0, 40], sizes = [16, 8], strides = [1, 1]} : vector<16x96xf32> to vector<16x8xf32>
    %36 = vector.extract_strided_slice %28 {offsets = [0, 48], sizes = [16, 8], strides = [1, 1]} : vector<16x96xf32> to vector<16x8xf32>
    %37 = vector.extract_strided_slice %28 {offsets = [0, 56], sizes = [16, 8], strides = [1, 1]} : vector<16x96xf32> to vector<16x8xf32>
    %38 = tpu.concatenate %34, %35, %36, %37 in 0 : vector<16x8xf32>, vector<16x8xf32>, vector<16x8xf32>, vector<16x8xf32> -> vector<64x8xf32>
    %39 = vector.extract_strided_slice %28 {offsets = [0, 64], sizes = [16, 8], strides = [1, 1]} : vector<16x96xf32> to vector<16x8xf32>
    %40 = vector.extract_strided_slice %28 {offsets = [0, 72], sizes = [16, 8], strides = [1, 1]} : vector<16x96xf32> to vector<16x8xf32>
    %41 = vector.extract_strided_slice %28 {offsets = [0, 80], sizes = [16, 8], strides = [1, 1]} : vector<16x96xf32> to vector<16x8xf32>
    %42 = vector.extract_strided_slice %28 {offsets = [0, 88], sizes = [16, 8], strides = [1, 1]} : vector<16x96xf32> to vector<16x8xf32>
    %43 = tpu.concatenate %39, %40, %41, %42 in 0 : vector<16x8xf32>, vector<16x8xf32>, vector<16x8xf32>, vector<16x8xf32> -> vector<64x8xf32>
    %44 = arith.truncf %33 : vector<64x8xf32> to vector<64x8xbf16>
    %45 = arith.truncf %38 : vector<64x8xf32> to vector<64x8xbf16>
    %cst_23 = arith.constant dense<0.000000e+00> : vector<64x64xf32>
    %46 = tpu.matmul %44, %45, %cst_23 {dimension_numbers = #tpu.dot_dimension_numbers<[1], [1], [0], [0], [0, 0, 1, 0], [], []>} : vector<64x8xbf16>, vector<64x8xbf16>, vector<64x64xf32> -> vector<64x64xf32>
    %47 = arith.addf %46, %6 : vector<64x64xf32>
    %cst_24 = arith.constant dense<0xFF800000> : vector<64xf32>
    %48 = vector.multi_reduction <maximumf>, %47, %cst_24 [1] : vector<64x64xf32> to vector<64xf32>
    %49 = vector.shape_cast %48 : vector<64xf32> to vector<64x1xf32>
    %50 = vector.broadcast %49 : vector<64x1xf32> to vector<64x64xf32>
    %51 = arith.subf %47, %50 : vector<64x64xf32>
    %52 = math.exp %51 : vector<64x64xf32>
    %cst_25 = arith.constant dense<0.000000e+00> : vector<64xf32>
    %53 = vector.multi_reduction <add>, %52, %cst_25 [1] : vector<64x64xf32> to vector<64xf32>
    %54 = vector.shape_cast %53 : vector<64xf32> to vector<64x1xf32>
    %55 = tpu.reciprocal %54 {approx = true} : vector<64x1xf32> -> vector<64x1xf32>
    %56 = vector.broadcast %55 : vector<64x1xf32> to vector<64x64xf32>
    %57 = arith.mulf %52, %56 : vector<64x64xf32>
    %58 = arith.truncf %57 : vector<64x64xf32> to vector<64x64xbf16>
    %59 = arith.truncf %43 : vector<64x8xf32> to vector<64x8xbf16>
    %cst_26 = arith.constant dense<0.000000e+00> : vector<64x8xf32>
    %60 = tpu.matmul %58, %59, %cst_26 {dimension_numbers = #tpu.dot_dimension_numbers<[1], [0], [0], [1], [0, 0, 1, 1], [], []>} : vector<64x64xbf16>, vector<64x8xbf16>, vector<64x8xf32> -> vector<64x8xf32>
    %61 = vector.extract_strided_slice %60 {offsets = [0, 0], sizes = [16, 8], strides = [1, 1]} : vector<64x8xf32> to vector<16x8xf32>
    %62 = vector.extract_strided_slice %60 {offsets = [16, 0], sizes = [16, 8], strides = [1, 1]} : vector<64x8xf32> to vector<16x8xf32>
    %63 = vector.extract_strided_slice %60 {offsets = [32, 0], sizes = [16, 8], strides = [1, 1]} : vector<64x8xf32> to vector<16x8xf32>
    %64 = vector.extract_strided_slice %60 {offsets = [48, 0], sizes = [16, 8], strides = [1, 1]} : vector<64x8xf32> to vector<16x8xf32>
    %65 = tpu.concatenate %61, %62, %63, %64 in 1 : vector<16x8xf32>, vector<16x8xf32>, vector<16x8xf32>, vector<16x8xf32> -> vector<16x32xf32>
    %66 = arith.truncf %65 : vector<16x32xf32> to vector<16x32xbf16>
    %cst_27 = arith.constant dense<0.000000e+00> : vector<16x32xf32>
    %67 = tpu.matmul %66, %10, %cst_27 {dimension_numbers = #tpu.dot_dimension_numbers<[1], [0], [0], [1], [0, 0, 1, 1], [], []>} : vector<16x32xbf16>, vector<32x32xbf16>, vector<16x32xf32> -> vector<16x32xf32>
    %68 = vector.broadcast %18 : vector<1x32xf32> to vector<16x32xf32>
    %69 = arith.addf %67, %68 : vector<16x32xf32>
    %70 = arith.addf %5, %69 : vector<16x32xf32>
    %cst_28 = arith.constant dense<0.000000e+00> : vector<16xf32>
    %71 = vector.multi_reduction <add>, %70, %cst_28 [1] : vector<16x32xf32> to vector<16xf32>
    %72 = vector.shape_cast %71 : vector<16xf32> to vector<16x1xf32>
    %cst_29 = arith.constant 3.200000e+01 : f32
    %73 = vector.broadcast %cst_29 : f32 to vector<16x1xf32>
    %74 = arith.divf %72, %73 : vector<16x1xf32>
    %75 = vector.broadcast %74 : vector<16x1xf32> to vector<16x32xf32>
    %76 = arith.subf %70, %75 : vector<16x32xf32>
    %77 = arith.mulf %76, %76 : vector<16x32xf32>
    %cst_30 = arith.constant dense<0.000000e+00> : vector<16xf32>
    %78 = vector.multi_reduction <add>, %77, %cst_30 [1] : vector<16x32xf32> to vector<16xf32>
    %79 = vector.shape_cast %78 : vector<16xf32> to vector<16x1xf32>
    %cst_31 = arith.constant 3.200000e+01 : f32
    %80 = vector.broadcast %cst_31 : f32 to vector<16x1xf32>
    %81 = arith.divf %79, %80 : vector<16x1xf32>
    %82 = vector.broadcast %74 : vector<16x1xf32> to vector<16x32xf32>
    %83 = arith.subf %70, %82 : vector<16x32xf32>
    %cst_32 = arith.constant 9.99999974E-6 : f32
    %84 = vector.broadcast %cst_32 : f32 to vector<16x1xf32>
    %85 = arith.addf %81, %84 : vector<16x1xf32>
    %86 = math.rsqrt %85 : vector<16x1xf32>
    %87 = vector.broadcast %86 : vector<16x1xf32> to vector<16x32xf32>
    %88 = arith.mulf %83, %87 : vector<16x32xf32>
    %89 = vector.broadcast %21 : vector<1x32xf32> to vector<16x32xf32>
    %90 = arith.mulf %88, %89 : vector<16x32xf32>
    %91 = vector.broadcast %22 : vector<1x32xf32> to vector<16x32xf32>
    %92 = arith.addf %90, %91 : vector<16x32xf32>
    %93 = arith.truncf %92 : vector<16x32xf32> to vector<16x32xbf16>
    %cst_33 = arith.constant dense<0.000000e+00> : vector<16x64xf32>
    %94 = tpu.matmul %93, %12, %cst_33 {dimension_numbers = #tpu.dot_dimension_numbers<[1], [0], [0], [1], [0, 0, 1, 1], [], []>} : vector<16x32xbf16>, vector<32x64xbf16>, vector<16x64xf32> -> vector<16x64xf32>
    %95 = vector.broadcast %19 : vector<1x64xf32> to vector<16x64xf32>
    %96 = arith.addf %94, %95 : vector<16x64xf32>
    %cst_34 = arith.constant 0.000000e+00 : f32
    %97 = vector.broadcast %cst_34 : f32 to vector<16x64xf32>
    %98 = arith.maximumf %96, %97 : vector<16x64xf32>
    %99 = arith.truncf %98 : vector<16x64xf32> to vector<16x64xbf16>
    %cst_35 = arith.constant dense<0.000000e+00> : vector<16x32xf32>
    %100 = tpu.matmul %99, %14, %cst_35 {dimension_numbers = #tpu.dot_dimension_numbers<[1], [0], [0], [1], [0, 0, 1, 1], [], []>} : vector<16x64xbf16>, vector<64x32xbf16>, vector<16x32xf32> -> vector<16x32xf32>
    %101 = vector.broadcast %20 : vector<1x32xf32> to vector<16x32xf32>
    %102 = arith.addf %100, %101 : vector<16x32xf32>
    %103 = arith.addf %92, %102 : vector<16x32xf32>
    %cst_36 = arith.constant dense<0.000000e+00> : vector<16xf32>
    %104 = vector.multi_reduction <add>, %103, %cst_36 [1] : vector<16x32xf32> to vector<16xf32>
    %105 = vector.shape_cast %104 : vector<16xf32> to vector<16x1xf32>
    %cst_37 = arith.constant 3.200000e+01 : f32
    %106 = vector.broadcast %cst_37 : f32 to vector<16x1xf32>
    %107 = arith.divf %105, %106 : vector<16x1xf32>
    %108 = vector.broadcast %107 : vector<16x1xf32> to vector<16x32xf32>
    %109 = arith.subf %103, %108 : vector<16x32xf32>
    %110 = arith.mulf %109, %109 : vector<16x32xf32>
    %cst_38 = arith.constant dense<0.000000e+00> : vector<16xf32>
    %111 = vector.multi_reduction <add>, %110, %cst_38 [1] : vector<16x32xf32> to vector<16xf32>
    %112 = vector.shape_cast %111 : vector<16xf32> to vector<16x1xf32>
    %cst_39 = arith.constant 3.200000e+01 : f32
    %113 = vector.broadcast %cst_39 : f32 to vector<16x1xf32>
    %114 = arith.divf %112, %113 : vector<16x1xf32>
    %115 = vector.broadcast %107 : vector<16x1xf32> to vector<16x32xf32>
    %116 = arith.subf %103, %115 : vector<16x32xf32>
    %cst_40 = arith.constant 9.99999974E-6 : f32
    %117 = vector.broadcast %cst_40 : f32 to vector<16x1xf32>
    %118 = arith.addf %114, %117 : vector<16x1xf32>
    %119 = math.rsqrt %118 : vector<16x1xf32>
    %120 = vector.broadcast %119 : vector<16x1xf32> to vector<16x32xf32>
    %121 = arith.mulf %116, %120 : vector<16x32xf32>
    %122 = vector.broadcast %23 : vector<1x32xf32> to vector<16x32xf32>
    %123 = arith.mulf %121, %122 : vector<16x32xf32>
    %124 = vector.broadcast %24 : vector<1x32xf32> to vector<16x32xf32>
    %125 = arith.addf %123, %124 : vector<16x32xf32>
    %c1 = arith.constant 1 : index
    %c0_41 = arith.constant 0 : index
    %c0_42 = arith.constant 0 : index
    %126 = vector.load %arg4[%c1, %c0_41, %c0_42] : memref<2x32x96xbf16, #tpu.memory_space<vmem>>, vector<1x32x96xbf16>
    %127 = vector.shape_cast %126 : vector<1x32x96xbf16> to vector<32x96xbf16>
    %c1_43 = arith.constant 1 : index
    %c0_44 = arith.constant 0 : index
    %c0_45 = arith.constant 0 : index
    %128 = vector.load %arg5[%c1_43, %c0_44, %c0_45] : memref<2x32x32xbf16, #tpu.memory_space<vmem>>, vector<1x32x32xbf16>
    %129 = vector.shape_cast %128 : vector<1x32x32xbf16> to vector<32x32xbf16>
    %c1_46 = arith.constant 1 : index
    %c0_47 = arith.constant 0 : index
    %c0_48 = arith.constant 0 : index
    %130 = vector.load %arg6[%c1_46, %c0_47, %c0_48] : memref<2x32x64xbf16, #tpu.memory_space<vmem>>, vector<1x32x64xbf16>
    %131 = vector.shape_cast %130 : vector<1x32x64xbf16> to vector<32x64xbf16>
    %c1_49 = arith.constant 1 : index
    %c0_50 = arith.constant 0 : index
    %c0_51 = arith.constant 0 : index
    %132 = vector.load %arg7[%c1_49, %c0_50, %c0_51] : memref<2x64x32xbf16, #tpu.memory_space<vmem>>, vector<1x64x32xbf16>
    %133 = vector.shape_cast %132 : vector<1x64x32xbf16> to vector<64x32xbf16>
    %c1_52 = arith.constant 1 : index
    %c0_53 = arith.constant 0 : index
    %c0_54 = arith.constant 0 : index
    %134 = vector.load %arg8[%c1_52, %c0_53, %c0_54] : memref<2x8x128xf32, #tpu.memory_space<vmem>>, vector<1x8x128xf32>
    %135 = vector.shape_cast %134 : vector<1x8x128xf32> to vector<8x128xf32>
    %136 = vector.extract_strided_slice %135 {offsets = [0, 0], sizes = [1, 96], strides = [1, 1]} : vector<8x128xf32> to vector<1x96xf32>
    %137 = vector.extract_strided_slice %135 {offsets = [1, 0], sizes = [1, 32], strides = [1, 1]} : vector<8x128xf32> to vector<1x32xf32>
    %138 = vector.extract_strided_slice %135 {offsets = [2, 0], sizes = [1, 64], strides = [1, 1]} : vector<8x128xf32> to vector<1x64xf32>
    %139 = vector.extract_strided_slice %135 {offsets = [3, 0], sizes = [1, 32], strides = [1, 1]} : vector<8x128xf32> to vector<1x32xf32>
    %140 = vector.extract_strided_slice %135 {offsets = [4, 0], sizes = [1, 32], strides = [1, 1]} : vector<8x128xf32> to vector<1x32xf32>
    %141 = vector.extract_strided_slice %135 {offsets = [5, 0], sizes = [1, 32], strides = [1, 1]} : vector<8x128xf32> to vector<1x32xf32>
    %142 = vector.extract_strided_slice %135 {offsets = [6, 0], sizes = [1, 32], strides = [1, 1]} : vector<8x128xf32> to vector<1x32xf32>
    %143 = vector.extract_strided_slice %135 {offsets = [7, 0], sizes = [1, 32], strides = [1, 1]} : vector<8x128xf32> to vector<1x32xf32>
    %144 = arith.truncf %125 : vector<16x32xf32> to vector<16x32xbf16>
    %cst_55 = arith.constant dense<0.000000e+00> : vector<16x96xf32>
    %145 = tpu.matmul %144, %127, %cst_55 {dimension_numbers = #tpu.dot_dimension_numbers<[1], [0], [0], [1], [0, 0, 1, 1], [], []>} : vector<16x32xbf16>, vector<32x96xbf16>, vector<16x96xf32> -> vector<16x96xf32>
    %146 = vector.broadcast %136 : vector<1x96xf32> to vector<16x96xf32>
    %147 = arith.addf %145, %146 : vector<16x96xf32>
    %148 = vector.extract_strided_slice %147 {offsets = [0, 0], sizes = [16, 8], strides = [1, 1]} : vector<16x96xf32> to vector<16x8xf32>
    %149 = vector.extract_strided_slice %147 {offsets = [0, 8], sizes = [16, 8], strides = [1, 1]} : vector<16x96xf32> to vector<16x8xf32>
    %150 = vector.extract_strided_slice %147 {offsets = [0, 16], sizes = [16, 8], strides = [1, 1]} : vector<16x96xf32> to vector<16x8xf32>
    %151 = vector.extract_strided_slice %147 {offsets = [0, 24], sizes = [16, 8], strides = [1, 1]} : vector<16x96xf32> to vector<16x8xf32>
    %152 = tpu.concatenate %148, %149, %150, %151 in 0 : vector<16x8xf32>, vector<16x8xf32>, vector<16x8xf32>, vector<16x8xf32> -> vector<64x8xf32>
    %153 = vector.extract_strided_slice %147 {offsets = [0, 32], sizes = [16, 8], strides = [1, 1]} : vector<16x96xf32> to vector<16x8xf32>
    %154 = vector.extract_strided_slice %147 {offsets = [0, 40], sizes = [16, 8], strides = [1, 1]} : vector<16x96xf32> to vector<16x8xf32>
    %155 = vector.extract_strided_slice %147 {offsets = [0, 48], sizes = [16, 8], strides = [1, 1]} : vector<16x96xf32> to vector<16x8xf32>
    %156 = vector.extract_strided_slice %147 {offsets = [0, 56], sizes = [16, 8], strides = [1, 1]} : vector<16x96xf32> to vector<16x8xf32>
    %157 = tpu.concatenate %153, %154, %155, %156 in 0 : vector<16x8xf32>, vector<16x8xf32>, vector<16x8xf32>, vector<16x8xf32> -> vector<64x8xf32>
    %158 = vector.extract_strided_slice %147 {offsets = [0, 64], sizes = [16, 8], strides = [1, 1]} : vector<16x96xf32> to vector<16x8xf32>
    %159 = vector.extract_strided_slice %147 {offsets = [0, 72], sizes = [16, 8], strides = [1, 1]} : vector<16x96xf32> to vector<16x8xf32>
    %160 = vector.extract_strided_slice %147 {offsets = [0, 80], sizes = [16, 8], strides = [1, 1]} : vector<16x96xf32> to vector<16x8xf32>
    %161 = vector.extract_strided_slice %147 {offsets = [0, 88], sizes = [16, 8], strides = [1, 1]} : vector<16x96xf32> to vector<16x8xf32>
    %162 = tpu.concatenate %158, %159, %160, %161 in 0 : vector<16x8xf32>, vector<16x8xf32>, vector<16x8xf32>, vector<16x8xf32> -> vector<64x8xf32>
    %163 = arith.truncf %152 : vector<64x8xf32> to vector<64x8xbf16>
    %164 = arith.truncf %157 : vector<64x8xf32> to vector<64x8xbf16>
    %cst_56 = arith.constant dense<0.000000e+00> : vector<64x64xf32>
    %165 = tpu.matmul %163, %164, %cst_56 {dimension_numbers = #tpu.dot_dimension_numbers<[1], [1], [0], [0], [0, 0, 1, 0], [], []>} : vector<64x8xbf16>, vector<64x8xbf16>, vector<64x64xf32> -> vector<64x64xf32>
    %166 = arith.addf %165, %6 : vector<64x64xf32>
    %cst_57 = arith.constant dense<0xFF800000> : vector<64xf32>
    %167 = vector.multi_reduction <maximumf>, %166, %cst_57 [1] : vector<64x64xf32> to vector<64xf32>
    %168 = vector.shape_cast %167 : vector<64xf32> to vector<64x1xf32>
    %169 = vector.broadcast %168 : vector<64x1xf32> to vector<64x64xf32>
    %170 = arith.subf %166, %169 : vector<64x64xf32>
    %171 = math.exp %170 : vector<64x64xf32>
    %cst_58 = arith.constant dense<0.000000e+00> : vector<64xf32>
    %172 = vector.multi_reduction <add>, %171, %cst_58 [1] : vector<64x64xf32> to vector<64xf32>
    %173 = vector.shape_cast %172 : vector<64xf32> to vector<64x1xf32>
    %174 = tpu.reciprocal %173 {approx = true} : vector<64x1xf32> -> vector<64x1xf32>
    %175 = vector.broadcast %174 : vector<64x1xf32> to vector<64x64xf32>
    %176 = arith.mulf %171, %175 : vector<64x64xf32>
    %177 = arith.truncf %176 : vector<64x64xf32> to vector<64x64xbf16>
    %178 = arith.truncf %162 : vector<64x8xf32> to vector<64x8xbf16>
    %cst_59 = arith.constant dense<0.000000e+00> : vector<64x8xf32>
    %179 = tpu.matmul %177, %178, %cst_59 {dimension_numbers = #tpu.dot_dimension_numbers<[1], [0], [0], [1], [0, 0, 1, 1], [], []>} : vector<64x64xbf16>, vector<64x8xbf16>, vector<64x8xf32> -> vector<64x8xf32>
    %180 = vector.extract_strided_slice %179 {offsets = [0, 0], sizes = [16, 8], strides = [1, 1]} : vector<64x8xf32> to vector<16x8xf32>
    %181 = vector.extract_strided_slice %179 {offsets = [16, 0], sizes = [16, 8], strides = [1, 1]} : vector<64x8xf32> to vector<16x8xf32>
    %182 = vector.extract_strided_slice %179 {offsets = [32, 0], sizes = [16, 8], strides = [1, 1]} : vector<64x8xf32> to vector<16x8xf32>
    %183 = vector.extract_strided_slice %179 {offsets = [48, 0], sizes = [16, 8], strides = [1, 1]} : vector<64x8xf32> to vector<16x8xf32>
    %184 = tpu.concatenate %180, %181, %182, %183 in 1 : vector<16x8xf32>, vector<16x8xf32>, vector<16x8xf32>, vector<16x8xf32> -> vector<16x32xf32>
    %185 = arith.truncf %184 : vector<16x32xf32> to vector<16x32xbf16>
    %cst_60 = arith.constant dense<0.000000e+00> : vector<16x32xf32>
    %186 = tpu.matmul %185, %129, %cst_60 {dimension_numbers = #tpu.dot_dimension_numbers<[1], [0], [0], [1], [0, 0, 1, 1], [], []>} : vector<16x32xbf16>, vector<32x32xbf16>, vector<16x32xf32> -> vector<16x32xf32>
    %187 = vector.broadcast %137 : vector<1x32xf32> to vector<16x32xf32>
    %188 = arith.addf %186, %187 : vector<16x32xf32>
    %189 = arith.addf %125, %188 : vector<16x32xf32>
    %cst_61 = arith.constant dense<0.000000e+00> : vector<16xf32>
    %190 = vector.multi_reduction <add>, %189, %cst_61 [1] : vector<16x32xf32> to vector<16xf32>
    %191 = vector.shape_cast %190 : vector<16xf32> to vector<16x1xf32>
    %cst_62 = arith.constant 3.200000e+01 : f32
    %192 = vector.broadcast %cst_62 : f32 to vector<16x1xf32>
    %193 = arith.divf %191, %192 : vector<16x1xf32>
    %194 = vector.broadcast %193 : vector<16x1xf32> to vector<16x32xf32>
    %195 = arith.subf %189, %194 : vector<16x32xf32>
    %196 = arith.mulf %195, %195 : vector<16x32xf32>
    %cst_63 = arith.constant dense<0.000000e+00> : vector<16xf32>
    %197 = vector.multi_reduction <add>, %196, %cst_63 [1] : vector<16x32xf32> to vector<16xf32>
    %198 = vector.shape_cast %197 : vector<16xf32> to vector<16x1xf32>
    %cst_64 = arith.constant 3.200000e+01 : f32
    %199 = vector.broadcast %cst_64 : f32 to vector<16x1xf32>
    %200 = arith.divf %198, %199 : vector<16x1xf32>
    %201 = vector.broadcast %193 : vector<16x1xf32> to vector<16x32xf32>
    %202 = arith.subf %189, %201 : vector<16x32xf32>
    %cst_65 = arith.constant 9.99999974E-6 : f32
    %203 = vector.broadcast %cst_65 : f32 to vector<16x1xf32>
    %204 = arith.addf %200, %203 : vector<16x1xf32>
    %205 = math.rsqrt %204 : vector<16x1xf32>
    %206 = vector.broadcast %205 : vector<16x1xf32> to vector<16x32xf32>
    %207 = arith.mulf %202, %206 : vector<16x32xf32>
    %208 = vector.broadcast %140 : vector<1x32xf32> to vector<16x32xf32>
    %209 = arith.mulf %207, %208 : vector<16x32xf32>
    %210 = vector.broadcast %141 : vector<1x32xf32> to vector<16x32xf32>
    %211 = arith.addf %209, %210 : vector<16x32xf32>
    %212 = arith.truncf %211 : vector<16x32xf32> to vector<16x32xbf16>
    %cst_66 = arith.constant dense<0.000000e+00> : vector<16x64xf32>
    %213 = tpu.matmul %212, %131, %cst_66 {dimension_numbers = #tpu.dot_dimension_numbers<[1], [0], [0], [1], [0, 0, 1, 1], [], []>} : vector<16x32xbf16>, vector<32x64xbf16>, vector<16x64xf32> -> vector<16x64xf32>
    %214 = vector.broadcast %138 : vector<1x64xf32> to vector<16x64xf32>
    %215 = arith.addf %213, %214 : vector<16x64xf32>
    %cst_67 = arith.constant 0.000000e+00 : f32
    %216 = vector.broadcast %cst_67 : f32 to vector<16x64xf32>
    %217 = arith.maximumf %215, %216 : vector<16x64xf32>
    %218 = arith.truncf %217 : vector<16x64xf32> to vector<16x64xbf16>
    %cst_68 = arith.constant dense<0.000000e+00> : vector<16x32xf32>
    %219 = tpu.matmul %218, %133, %cst_68 {dimension_numbers = #tpu.dot_dimension_numbers<[1], [0], [0], [1], [0, 0, 1, 1], [], []>} : vector<16x64xbf16>, vector<64x32xbf16>, vector<16x32xf32> -> vector<16x32xf32>
    %220 = vector.broadcast %139 : vector<1x32xf32> to vector<16x32xf32>
    %221 = arith.addf %219, %220 : vector<16x32xf32>
    %222 = arith.addf %211, %221 : vector<16x32xf32>
    %cst_69 = arith.constant dense<0.000000e+00> : vector<16xf32>
    %223 = vector.multi_reduction <add>, %222, %cst_69 [1] : vector<16x32xf32> to vector<16xf32>
    %224 = vector.shape_cast %223 : vector<16xf32> to vector<16x1xf32>
    %cst_70 = arith.constant 3.200000e+01 : f32
    %225 = vector.broadcast %cst_70 : f32 to vector<16x1xf32>
    %226 = arith.divf %224, %225 : vector<16x1xf32>
    %227 = vector.broadcast %226 : vector<16x1xf32> to vector<16x32xf32>
    %228 = arith.subf %222, %227 : vector<16x32xf32>
    %229 = arith.mulf %228, %228 : vector<16x32xf32>
    %cst_71 = arith.constant dense<0.000000e+00> : vector<16xf32>
    %230 = vector.multi_reduction <add>, %229, %cst_71 [1] : vector<16x32xf32> to vector<16xf32>
    %231 = vector.shape_cast %230 : vector<16xf32> to vector<16x1xf32>
    %cst_72 = arith.constant 3.200000e+01 : f32
    %232 = vector.broadcast %cst_72 : f32 to vector<16x1xf32>
    %233 = arith.divf %231, %232 : vector<16x1xf32>
    %234 = vector.broadcast %226 : vector<16x1xf32> to vector<16x32xf32>
    %235 = arith.subf %222, %234 : vector<16x32xf32>
    %cst_73 = arith.constant 9.99999974E-6 : f32
    %236 = vector.broadcast %cst_73 : f32 to vector<16x1xf32>
    %237 = arith.addf %233, %236 : vector<16x1xf32>
    %238 = math.rsqrt %237 : vector<16x1xf32>
    %239 = vector.broadcast %238 : vector<16x1xf32> to vector<16x32xf32>
    %240 = arith.mulf %235, %239 : vector<16x32xf32>
    %241 = vector.broadcast %142 : vector<1x32xf32> to vector<16x32xf32>
    %242 = arith.mulf %240, %241 : vector<16x32xf32>
    %243 = vector.broadcast %143 : vector<1x32xf32> to vector<16x32xf32>
    %244 = arith.addf %242, %243 : vector<16x32xf32>
    %c0_74 = arith.constant 0 : index
    %c0_75 = arith.constant 0 : index
    %245 = vector.load %arg9[%c0_74, %c0_75] : memref<2x32xf32, #tpu.memory_space<vmem>>, vector<2x32xf32>
    %246 = vector.extract_strided_slice %245 {offsets = [0, 0], sizes = [1, 32], strides = [1, 1]} : vector<2x32xf32> to vector<1x32xf32>
    %247 = vector.extract_strided_slice %245 {offsets = [1, 0], sizes = [1, 32], strides = [1, 1]} : vector<2x32xf32> to vector<1x32xf32>
    %cst_76 = arith.constant dense<0.000000e+00> : vector<16xf32>
    %248 = vector.multi_reduction <add>, %244, %cst_76 [1] : vector<16x32xf32> to vector<16xf32>
    %249 = vector.shape_cast %248 : vector<16xf32> to vector<16x1xf32>
    %cst_77 = arith.constant 3.200000e+01 : f32
    %250 = vector.broadcast %cst_77 : f32 to vector<16x1xf32>
    %251 = arith.divf %249, %250 : vector<16x1xf32>
    %252 = vector.broadcast %251 : vector<16x1xf32> to vector<16x32xf32>
    %253 = arith.subf %244, %252 : vector<16x32xf32>
    %254 = arith.mulf %253, %253 : vector<16x32xf32>
    %cst_78 = arith.constant dense<0.000000e+00> : vector<16xf32>
    %255 = vector.multi_reduction <add>, %254, %cst_78 [1] : vector<16x32xf32> to vector<16xf32>
    %256 = vector.shape_cast %255 : vector<16xf32> to vector<16x1xf32>
    %cst_79 = arith.constant 3.200000e+01 : f32
    %257 = vector.broadcast %cst_79 : f32 to vector<16x1xf32>
    %258 = arith.divf %256, %257 : vector<16x1xf32>
    %259 = vector.broadcast %251 : vector<16x1xf32> to vector<16x32xf32>
    %260 = arith.subf %244, %259 : vector<16x32xf32>
    %cst_80 = arith.constant 9.99999974E-6 : f32
    %261 = vector.broadcast %cst_80 : f32 to vector<16x1xf32>
    %262 = arith.addf %258, %261 : vector<16x1xf32>
    %263 = math.rsqrt %262 : vector<16x1xf32>
    %264 = vector.broadcast %263 : vector<16x1xf32> to vector<16x32xf32>
    %265 = arith.mulf %260, %264 : vector<16x32xf32>
    %266 = vector.broadcast %246 : vector<1x32xf32> to vector<16x32xf32>
    %267 = arith.mulf %265, %266 : vector<16x32xf32>
    %268 = vector.broadcast %247 : vector<1x32xf32> to vector<16x32xf32>
    %269 = arith.addf %267, %268 : vector<16x32xf32>
    %c0_81 = arith.constant 0 : index
    %c0_82 = arith.constant 0 : index
    %270 = vector.load %arg10[%c0_81, %c0_82] : memref<16x32xf32, #tpu.memory_space<vmem>>, vector<16x32xf32>
    tpu.vector_store %arg10[%c0_81, %c0_82], %269 {strides = array<i32>} : memref<16x32xf32, #tpu.memory_space<vmem>>, vector<16x32xf32>,
    return
  }
}

</mosaic_0001>

<llo_original>
// kernel: tpu_custom_call.1
$region0: #{tpu_custom_call.1}
  #allocation0 [shape = 'u32[]', space=smem, size = 0x4, offset = 0x4, fixed_abs, tag = 'smem constant byte address 0x4 - core index']
  #allocation1 [shape = 'u32[144,128]{1,0:T(1,128)}', space=vmem, size = 0x12000, scoped, tag = 'internal scratch']
  %s0 = inlined_call_operand.hbm [shape: f32[16,16], index: 0, kind: input, shape index: {}]
  %s1 = inlined_call_operand.hbm [shape: bf16[16,32], index: 1, kind: input, shape index: {}]
  %s2 = inlined_call_operand.hbm [shape: f32[16,32], index: 2, kind: input, shape index: {}]
  %s3 = inlined_call_operand.vmem [shape: f32[64,64], index: 3, kind: input, shape index: {}]
  %s4 = inlined_call_operand.vmem [shape: bf16[2,32,96], index: 4, kind: input, shape index: {}]
  %s5 = inlined_call_operand.hbm [shape: bf16[2,32,32], index: 5, kind: input, shape index: {}]
  %s6 = inlined_call_operand.hbm [shape: bf16[2,32,64], index: 6, kind: input, shape index: {}]
  %s7 = inlined_call_operand.vmem [shape: bf16[2,64,32], index: 7, kind: input, shape index: {}]
  %s8 = inlined_call_operand.vmem [shape: f32[2,8,128], index: 8, kind: input, shape index: {}]
  %s9 = inlined_call_operand.vmem [shape: f32[2,32], index: 9, kind: input, shape index: {}]
  %s10 = inlined_call_operand.hbm [shape: f32[16,32], index: 10, kind: output, shape index: {}]
  %s11 = sld [smem:[#allocation0]]
  $region70: #{tpu_custom_call.1} parent=0
    _
  %s13 = ssub.s32 1, %s11
  %s14 = scalar_select 0, %s13, %s11
  $region1: #{tpu_custom_call.1} parent=0
    #allocation2 [shape = 'u8[8192]{0}', space=vmem, size = 0x2000, scoped, tag = 'input window, operand 0, single buffered']
    #allocation3 [shape = 's32[1]{0}', space=sflag, size = 0x4, scoped, tag = 'scoped memory for tpu_custom_call.1']
    #allocation4 [shape = 's32[1]{0}', space=sflag, size = 0x4, scoped, tag = 'scoped memory for tpu_custom_call.1']
    #allocation5 [shape = 'u8[4096]{0}', space=vmem, size = 0x1000, scoped, tag = 'input window, operand 1, single buffered']
    #allocation6 [shape = 's32[1]{0}', space=sflag, size = 0x4, scoped, tag = 'scoped memory for tpu_custom_call.1']
    #allocation7 [shape = 'u8[8192]{0}', space=vmem, size = 0x2000, scoped, tag = 'input window, operand 2, single buffered']
    #allocation8 [shape = 'u8[16384]{0}', space=vmem, size = 0x4000, scoped, tag = 'input window, operand 5, single buffered']
    #allocation9 [shape = 's32[1]{0}', space=sflag, size = 0x4, scoped, tag = 'scoped memory for tpu_custom_call.1']
    #allocation10 [shape = 'u8[16384]{0}', space=vmem, size = 0x4000, scoped, tag = 'input window, operand 6, single buffered']
    #allocation11 [shape = 'u8[8192]{0}', space=vmem, size = 0x2000, scoped, tag = 'output window, operand 0, single buffered']
    %15 = vsyncpa [#allocation3], 0
    %16 = vsyncpa [#allocation6], 0
    %17 = vsyncpa [#allocation9], 0
    %18 = vsyncpa [#allocation4], 0
    // Predicated region
    $region2: #{tpu_custom_call.1} parent=1 // pred_check
      _
    $region3: #{tpu_custom_call.1} parent=1 // pred_check_branch
      %20 = sbr.rel (0) target = $region5
    $region4: #{tpu_custom_call.1} parent=1 // pred_region
      %s22 = ssub.s32 256, 256
      %23 = vsyncadd [#allocation3], %s22
      %s24 = sshll.u32 [#allocation2], 4
      %s25 = int_to_ptr.vmem [resolvable:$true] %s24
      %30 = dma.hbm_to_vmem [thread:$0]  %s0, 256, %s25, [#allocation3], 128, 128, 8
    $region5: #{tpu_custom_call.1} parent=1 // pred_fallthru
      _
    // Predicated region
    $region6: #{tpu_custom_call.1} parent=1 // pred_check
      _
    $region7: #{tpu_custom_call.1} parent=1 // pred_check_branch
      %32 = sbr.rel (0) target = $region9
    $region8: #{tpu_custom_call.1} parent=1 // pred_region
      %s34 = ssub.s32 128, 128
      %35 = vsyncadd [#allocation6], %s34
      %s36 = sshll.u32 [#allocation5], 4
      %s37 = int_to_ptr.vmem [resolvable:$true] %s36
      %42 = dma.hbm_to_vmem [thread:$0]  %s1, 128, %s37, [#allocation6], 64, 64, 4
    $region9: #{tpu_custom_call.1} parent=1 // pred_fallthru
      _
    // Predicated region
    $region10: #{tpu_custom_call.1} parent=1 // pred_check
      _
    $region11: #{tpu_custom_call.1} parent=1 // pred_check_branch
      %44 = sbr.rel (0) target = $region13
    $region12: #{tpu_custom_call.1} parent=1 // pred_region
      %s46 = ssub.s32 256, 256
      %47 = vsyncadd [#allocation6], %s46
      %s48 = sshll.u32 [#allocation7], 4
      %s49 = int_to_ptr.vmem [resolvable:$true] %s48
      %54 = dma.hbm_to_vmem [thread:$0]  %s2, 256, %s49, [#allocation6], 128, 128, 8
    $region13: #{tpu_custom_call.1} parent=1 // pred_fallthru
      _
    // Predicated region
    $region14: #{tpu_custom_call.1} parent=1 // pred_check
      _
    $region15: #{tpu_custom_call.1} parent=1 // pred_check_branch
      %56 = sbr.rel (0) target = $region17
    $region16: #{tpu_custom_call.1} parent=1 // pred_region
      _
    $region17: #{tpu_custom_call.1} parent=1 // pred_fallthru
      _
    // Predicated region
    $region18: #{tpu_custom_call.1} parent=1 // pred_check
      _
    $region19: #{tpu_custom_call.1} parent=1 // pred_check_branch
      %58 = sbr.rel (0) target = $region21
    $region20: #{tpu_custom_call.1} parent=1 // pred_region
      _
    $region21: #{tpu_custom_call.1} parent=1 // pred_fallthru
      _
    // Predicated region
    $region22: #{tpu_custom_call.1} parent=1 // pred_check
      _
    $region23: #{tpu_custom_call.1} parent=1 // pred_check_branch
      %60 = sbr.rel (0) target = $region25
    $region24: #{tpu_custom_call.1} parent=1 // pred_region
      %s62 = ssub.s32 512, 512
      %63 = vsyncadd [#allocation9], %s62
      %s64 = sshll.u32 [#allocation8], 4
      %s65 = int_to_ptr.vmem [resolvable:$true] %s64
      %70 = dma.hbm_to_vmem [thread:$0]  %s5, 512, %s65, [#allocation9], 64, 64, 4
    $region25: #{tpu_custom_call.1} parent=1 // pred_fallthru
      _
    // Predicated region
    $region26: #{tpu_custom_call.1} parent=1 // pred_check
      _
    $region27: #{tpu_custom_call.1} parent=1 // pred_check_branch
      %72 = sbr.rel (0) target = $region29
    $region28: #{tpu_custom_call.1} parent=1 // pred_region
      %s74 = ssub.s32 512, 512
      %75 = vsyncadd [#allocation9], %s74
      %s76 = sshll.u32 [#allocation10], 4
      %s77 = int_to_ptr.vmem [resolvable:$true] %s76
      %82 = dma.hbm_to_vmem [thread:$0]  %s6, 512, %s77, [#allocation9], 64, 64, 4
    $region29: #{tpu_custom_call.1} parent=1 // pred_fallthru
      _
    // Predicated region
    $region30: #{tpu_custom_call.1} parent=1 // pred_check
      _
    $region31: #{tpu_custom_call.1} parent=1 // pred_check_branch
      %84 = sbr.rel (0) target = $region33
    $region32: #{tpu_custom_call.1} parent=1 // pred_region
      _
    $region33: #{tpu_custom_call.1} parent=1 // pred_fallthru
      _
    // Predicated region
    $region34: #{tpu_custom_call.1} parent=1 // pred_check
      _
    $region35: #{tpu_custom_call.1} parent=1 // pred_check_branch
      %86 = sbr.rel (0) target = $region37
    $region36: #{tpu_custom_call.1} parent=1 // pred_region
      _
    $region37: #{tpu_custom_call.1} parent=1 // pred_fallthru
      _
    // Predicated region
    $region38: #{tpu_custom_call.1} parent=1 // pred_check
      _
    $region39: #{tpu_custom_call.1} parent=1 // pred_check_branch
      %88 = sbr.rel (0) target = $region41
    $region40: #{tpu_custom_call.1} parent=1 // pred_region
      _
    $region41: #{tpu_custom_call.1} parent=1 // pred_fallthru
      _
    // Predicated region
    $region42: #{tpu_custom_call.1} parent=1 // pred_check
      _
    $region43: #{tpu_custom_call.1} parent=1 // pred_check_branch
      %90 = sbr.rel (0) target = $region45
    $region44: #{tpu_custom_call.1} parent=1 // pred_region
      %91 = dma.done [#allocation3], 256
    $region45: #{tpu_custom_call.1} parent=1 // pred_fallthru
      _
    // Predicated region
    $region46: #{tpu_custom_call.1} parent=1 // pred_check
      _
    $region47: #{tpu_custom_call.1} parent=1 // pred_check_branch
      %93 = sbr.rel (0) target = $region49
    $region48: #{tpu_custom_call.1} parent=1 // pred_region
      %94 = dma.done [#allocation6], 128
    $region49: #{tpu_custom_call.1} parent=1 // pred_fallthru
      _
    // Predicated region
    $region50: #{tpu_custom_call.1} parent=1 // pred_check
      _
    $region51: #{tpu_custom_call.1} parent=1 // pred_check_branch
      %96 = sbr.rel (0) target = $region53
    $region52: #{tpu_custom_call.1} parent=1 // pred_region
      %97 = dma.done [#allocation6], 256
    $region53: #{tpu_custom_call.1} parent=1 // pred_fallthru
      _
    // Predicated region
    $region54: #{tpu_custom_call.1} parent=1 // pred_check
      _
    $region55: #{tpu_custom_call.1} parent=1 // pred_check_branch
      %99 = sbr.rel (0) target = $region57
    $region56: #{tpu_custom_call.1} parent=1 // pred_region
      %100 = dma.done [#allocation9], 512
    $region57: #{tpu_custom_call.1} parent=1 // pred_fallthru
      _
    // Predicated region
    $region58: #{tpu_custom_call.1} parent=1 // pred_check
      _
    $region59: #{tpu_custom_call.1} parent=1 // pred_check_branch
      %102 = sbr.rel (0) target = $region61
    $region60: #{tpu_custom_call.1} parent=1 // pred_region
      %103 = dma.done [#allocation9], 512
    $region61: #{tpu_custom_call.1} parent=1 // pred_fallthru
      _
    %v105 = vld [vmem:[#allocation2] sm:$0xff]
    %v106 = vld [vmem:[#allocation2 + $0x8] sm:$0xff]
    %v107 = vpack.c.bf16 %v106, %v105
    %v108 = vld [vmem:[#allocation5] sm:$0xf]
    %v109 = vld [vmem:[#allocation5 + $0x4] sm:$0xf]
    %v110 = vld [vmem:[#allocation7] sm:$0xff]
    %v111 = vld [vmem:[#allocation7 + $0x8] sm:$0xff]
    %v114 = vunpack.c.l.b16 %v108
    %v115 = vunpack.c.l.b16 %v109
    %v116 = vpack.c.b16 %v115, %v114
    %vm118 = vcmask 130048
    %v120 = vsel %vm118, %v107, 0
    %122 = vmatprep.subr.bf16.mxu0 0
    %123 = vmatpush1.bf16.msra.mxu0 %v116
    %124 = vmatprep.subr.bf16.mxu0 0
    %125 = vmatpush1.bf16.msra.mxu0 0
    %126 = vmatprep.subr.bf16.mxu0 0
    %127 = vmatpush1.bf16.msra.mxu0 0
    %128 = vmatprep.subr.bf16.mxu0 0
    %129 = vmatpush1.bf16.msra.mxu0 0
    %130 = vmatprep.subr.bf16.mxu0 0
    %131 = vmatpush1.bf16.msra.mxu0 0
    %132 = vmatprep.subr.bf16.mxu0 0
    %133 = vmatpush1.bf16.msra.mxu0 0
    %134 = vmatprep.subr.bf16.mxu0 0
    %135 = vmatpush1.bf16.msra.mxu0 0
    %136 = vmatprep.subr.bf16.mxu0 0
    %137 = vmatpush1.bf16.msra.mxu0 0
    %138 = vmatprep.subr.bf16.mxu0 0
    %139 = vmatpush1.bf16.msra.mxu0 0
    %140 = vmatprep.subr.bf16.mxu0 0
    %141 = vmatpush1.bf16.msra.mxu0 0
    %142 = vmatprep.subr.bf16.mxu0 0
    %143 = vmatpush1.bf16.msra.mxu0 0
    %144 = vmatprep.subr.bf16.mxu0 0
    %145 = vmatpush1.bf16.msra.mxu0 0
    %146 = vmatprep.subr.bf16.mxu0 0
    %147 = vmatpush1.bf16.msra.mxu0 0
    %148 = vmatprep.subr.bf16.mxu0 0
    %149 = vmatpush1.bf16.msra.mxu0 0
    %150 = vmatprep.subr.bf16.mxu0 0
    %151 = vmatpush1.bf16.msra.mxu0 0
    %152 = vmatprep.subr.bf16.mxu0 0
    %153 = vmatpush1.bf16.msra.mxu0 0
    %154 = vmatprep.mubr.bf16.mxu0 0
    %155 = vmatmul.mubr.bf16.gmra.mrb[0].mxu0 %v120
    %v156 = vpop.f32.mrb[0].mxu0
    %v157 = vadd.f32 %v110, %v156
    %v158 = vpop.f32.mrb[0].mxu0
    %v159 = vpop.f32.mrb[0].mxu0
    %v160 = vadd.f32 %v111, %v159
    %v161 = vpop.f32.mrb[0].mxu0
    %162 = vdwg.mxu0
    %v163 = vld [vmem:[%s3] sm:$0xff]
    %v164 = vld [vmem:[%s3 + $0x8] sm:$0xff]
    %v165 = vld [vmem:[%s3 + $0x10] sm:$0xff]
    %v166 = vld [vmem:[%s3 + $0x18] sm:$0xff]
    %v167 = vld [vmem:[%s3 + $0x20] sm:$0xff]
    %v168 = vld [vmem:[%s3 + $0x28] sm:$0xff]
    %v169 = vld [vmem:[%s3 + $0x30] sm:$0xff]
    %v170 = vld [vmem:[%s3 + $0x38] sm:$0xff]
    %v171 = vld [vmem:[%s4] sm:$0xf]
    %v172 = vld [vmem:[%s4 + $0x4] sm:$0xf]
    %v173 = vld [vmem:[%s4 + $0x8] sm:$0xf]
    %v174 = vld [vmem:[%s4 + $0xc] sm:$0xf]
    %v175 = vld [vmem:[#allocation8] sm:$0xf]
    %v176 = vld [vmem:[#allocation8 + $0x4] sm:$0xf]
    %v177 = vld [vmem:[#allocation8 + $0x8] sm:$0xf]
    %v178 = vld [vmem:[#allocation8 + $0xc] sm:$0xf]
    %v179 = vld [vmem:[#allocation10] sm:$0xf]
    %v180 = vld [vmem:[#allocation10 + $0x4] sm:$0xf]
    %v181 = vld [vmem:[#allocation10 + $0x8] sm:$0xf]
    %v182 = vld [vmem:[#allocation10 + $0xc] sm:$0xf]
    %v183 = vld [vmem:[%s7] sm:$0xf]
    %v184 = vld [vmem:[%s7 + $0x4] sm:$0xf]
    %v185 = vld [vmem:[%s7 + $0x8] sm:$0xf]
    %v186 = vld [vmem:[%s7 + $0xc] sm:$0xf]
    %v187 = vld [vmem:[%s7 + $0x10] sm:$0xf]
    %v188 = vld [vmem:[%s7 + $0x14] sm:$0xf]
    %v189 = vld [vmem:[%s7 + $0x18] sm:$0xf]
    %v190 = vld [vmem:[%s7 + $0x1c] sm:$0xf]
    %v191 = vld [vmem:[%s8] sm:$0xff]
    %v192 = vpack.c.bf16 %v160, %v157
    %v193 = vlaneseq
    %v194 = vshrl.u32 %v193, 7
    %v195 = vsub.s32 0, %v194
    %v196 = vrot.slane %v191, %v195
    %v201 = vunpack.c.l.b16 %v171
    %v202 = vunpack.c.l.b16 %v172
    %v203 = vunpack.c.l.b16 %v173
    %v204 = vunpack.c.l.b16 %v174
    %v205 = vpack.c.b16 %v202, %v201
    %v206 = vpack.c.b16 %v204, %v203
    %vm209 = vcmask 261120
    %v211 = vsel %vm209, %v192, 0
    %213 = vmatprep.subr.bf16.mxu0 0
    %214 = vmatpush1.bf16.msra.mxu0 %v205
    %215 = vmatprep.subr.bf16.mxu0 0
    %216 = vmatpush1.bf16.msra.mxu0 %v206
    %217 = vmatprep.subr.bf16.mxu0 0
    %218 = vmatpush1.bf16.msra.mxu0 0
    %219 = vmatprep.subr.bf16.mxu0 0
    %220 = vmatpush1.bf16.msra.mxu0 0
    %221 = vmatprep.subr.bf16.mxu0 0
    %222 = vmatpush1.bf16.msra.mxu0 0
    %223 = vmatprep.subr.bf16.mxu0 0
    %224 = vmatpush1.bf16.msra.mxu0 0
    %225 = vmatprep.subr.bf16.mxu0 0
    %226 = vmatpush1.bf16.msra.mxu0 0
    %227 = vmatprep.subr.bf16.mxu0 0
    %228 = vmatpush1.bf16.msra.mxu0 0
    %229 = vmatprep.subr.bf16.mxu0 0
    %230 = vmatpush1.bf16.msra.mxu0 0
    %231 = vmatprep.subr.bf16.mxu0 0
    %232 = vmatpush1.bf16.msra.mxu0 0
    %233 = vmatprep.subr.bf16.mxu0 0
    %234 = vmatpush1.bf16.msra.mxu0 0
    %235 = vmatprep.subr.bf16.mxu0 0
    %236 = vmatpush1.bf16.msra.mxu0 0
    %237 = vmatprep.subr.bf16.mxu0 0
    %238 = vmatpush1.bf16.msra.mxu0 0
    %239 = vmatprep.subr.bf16.mxu0 0
    %240 = vmatpush1.bf16.msra.mxu0 0
    %241 = vmatprep.subr.bf16.mxu0 0
    %242 = vmatpush1.bf16.msra.mxu0 0
    %243 = vmatprep.subr.bf16.mxu0 0
    %244 = vmatpush1.bf16.msra.mxu0 0
    %245 = vmatprep.mubr.bf16.mxu0 0
    %246 = vmatmul.mubr.bf16.gmra.mrb[0].mxu0 %v211
    %v247 = vpop.f32.mrb[0].mxu0
    %v248 = vadd.f32 %v196, %v247
    %v249 = vpop.f32.mrb[0].mxu0
    %v250 = vpop.f32.mrb[0].mxu0
    %v251 = vadd.f32 %v196, %v250
    %v252 = vpop.f32.mrb[0].mxu0
    %253 = vdwg.mxu0
    %256 = vrot.lane.b32.xlu0 %v248, 120
    %v257 = vpop.permute.xlu0 %256
    %258 = vrot.lane.b32.xlu0 %v251, 120
    %v259 = vpop.permute.xlu0 %258
    %262 = vrot.lane.b32.xlu0 %v248, 112
    %v263 = vpop.permute.xlu0 %262
    %264 = vrot.lane.b32.xlu0 %v251, 112
    %v265 = vpop.permute.xlu0 %264
    %268 = vrot.lane.b32.xlu0 %v248, 104
    %v269 = vpop.permute.xlu0 %268
    %270 = vrot.lane.b32.xlu0 %v251, 104
    %v271 = vpop.permute.xlu0 %270
    %v274 = vpack.c.bf16 %v251, %v248
    %v275 = vpack.c.bf16 %v259, %v257
    %v276 = vpack.c.bf16 %v265, %v263
    %v277 = vpack.c.bf16 %v271, %v269
    %282 = vrot.lane.b32.xlu0 %v274, 96
    %v283 = vpop.permute.xlu0 %282
    %284 = vrot.lane.b32.xlu0 %v275, 96
    %v285 = vpop.permute.xlu0 %284
    %286 = vrot.lane.b32.xlu0 %v276, 96
    %v287 = vpop.permute.xlu0 %286
    %288 = vrot.lane.b32.xlu0 %v277, 96
    %v289 = vpop.permute.xlu0 %288
    %vm290 = vcmask 64512
    %v292 = vsel %vm290, %v274, 0
    %v295 = vsel %vm290, %v275, 0
    %v298 = vsel %vm290, %v276, 0
    %v301 = vsel %vm290, %v277, 0
    %v304 = vsel %vm290, %v283, 0
    %v307 = vsel %vm290, %v285, 0
    %v310 = vsel %vm290, %v287, 0
    %v313 = vsel %vm290, %v289, 0
    %315 = vmatprep.subr.bf16.mxu0 0
    %316 = vmatpush1.bf16.xpose.msra.mxu0 %v304
    %317 = vmatprep.subr.bf16.mxu0 0
    %318 = vmatpush1.bf16.xpose.msra.mxu0 %v307
    %319 = vmatprep.subr.bf16.mxu0 0
    %320 = vmatpush1.bf16.xpose.msra.mxu0 %v310
    %321 = vmatprep.subr.bf16.mxu0 0
    %322 = vmatpush1.bf16.xpose.msra.mxu0 %v313
    %323 = vmatprep.subr.bf16.mxu0 0
    %324 = vmatpush1.bf16.xpose.msra.mxu0 0
    %325 = vmatprep.subr.bf16.mxu0 0
    %326 = vmatpush1.bf16.xpose.msra.mxu0 0
    %327 = vmatprep.subr.bf16.mxu0 0
    %328 = vmatpush1.bf16.xpose.msra.mxu0 0
    %329 = vmatprep.subr.bf16.mxu0 0
    %330 = vmatpush1.bf16.xpose.msra.mxu0 0
    %331 = vmatprep.subr.bf16.mxu0 0
    %332 = vmatpush1.bf16.xpose.msra.mxu0 0
    %333 = vmatprep.subr.bf16.mxu0 0
    %334 = vmatpush1.bf16.xpose.msra.mxu0 0
    %335 = vmatprep.subr.bf16.mxu0 0
    %336 = vmatpush1.bf16.xpose.msra.mxu0 0
    %337 = vmatprep.subr.bf16.mxu0 0
    %338 = vmatpush1.bf16.xpose.msra.mxu0 0
    %339 = vmatprep.subr.bf16.mxu0 0
    %340 = vmatpush1.bf16.xpose.msra.mxu0 0
    %341 = vmatprep.subr.bf16.mxu0 0
    %342 = vmatpush1.bf16.xpose.msra.mxu0 0
    %343 = vmatprep.subr.bf16.mxu0 0
    %344 = vmatpush1.bf16.xpose.msra.mxu0 0
    %345 = vmatprep.subr.bf16.mxu0 0
    %346 = vmatpush1.bf16.xpose.msra.mxu0 0
    %347 = vmatprep.mubr.bf16.mxu0 0
    %348 = vmatmul.mubr.bf16.gmra.mrb[0].mxu0 %v292
    %v349 = vpop.f32.mrb[0].mxu0
    %v350 = vadd.f32 %v163, %v349
    %v351 = vpop.f32.mrb[0].mxu0
    %v352 = vpop.f32.mrb[0].mxu0
    %v353 = vadd.f32 %v164, %v352
    %v354 = vpop.f32.mrb[0].mxu0
    %355 = vmatprep.mubr.bf16.mxu0 0
    %356 = vmatmul.mubr.bf16.gmra.mrb[0].mxu0 %v295
    %v357 = vpop.f32.mrb[0].mxu0
    %v358 = vadd.f32 %v165, %v357
    %v359 = vpop.f32.mrb[0].mxu0
    %v360 = vpop.f32.mrb[0].mxu0
    %v361 = vadd.f32 %v166, %v360
    %v362 = vpop.f32.mrb[0].mxu0
    %363 = vmatprep.mubr.bf16.mxu0 0
    %364 = vmatmul.mubr.bf16.gmra.mrb[0].mxu0 %v298
    %v365 = vpop.f32.mrb[0].mxu0
    %v366 = vadd.f32 %v167, %v365
    %v367 = vpop.f32.mrb[0].mxu0
    %v368 = vpop.f32.mrb[0].mxu0
    %v369 = vadd.f32 %v168, %v368
    %v370 = vpop.f32.mrb[0].mxu0
    %371 = vmatprep.mubr.bf16.mxu0 0
    %372 = vmatmul.mubr.bf16.gmra.mrb[0].mxu0 %v301
    %v373 = vpop.f32.mrb[0].mxu0
    %v374 = vadd.f32 %v169, %v373
    %v375 = vpop.f32.mrb[0].mxu0
    %v376 = vpop.f32.mrb[0].mxu0
    %v377 = vadd.f32 %v170, %v376
    %v378 = vpop.f32.mrb[0].mxu0
    %379 = vdwg.mxu0
    %vm380 = vcmask 523264
    %v381 = vsel %vm380, %v350, -inf
    %382 = vmax.xlane.f32.xlu0 %v381
    %v383 = vpop.xlane.xlu0 %382
    %v384 = vsel %vm380, %v353, -inf
    %385 = vmax.xlane.f32.xlu0 %v384
    %v386 = vpop.xlane.xlu0 %385
    %v387 = vsel %vm380, %v358, -inf
    %388 = vmax.xlane.f32.xlu0 %v387
    %v389 = vpop.xlane.xlu0 %388
    %v390 = vsel %vm380, %v361, -inf
    %391 = vmax.xlane.f32.xlu0 %v390
    %v392 = vpop.xlane.xlu0 %391
    %v393 = vsel %vm380, %v366, -inf
    %394 = vmax.xlane.f32.xlu0 %v393
    %v395 = vpop.xlane.xlu0 %394
    %v396 = vsel %vm380, %v369, -inf
    %397 = vmax.xlane.f32.xlu0 %v396
    %v398 = vpop.xlane.xlu0 %397
    %v399 = vsel %vm380, %v374, -inf
    %400 = vmax.xlane.f32.xlu0 %v399
    %v401 = vpop.xlane.xlu0 %400
    %v402 = vsel %vm380, %v377, -inf
    %403 = vmax.xlane.f32.xlu0 %v402
    %v404 = vpop.xlane.xlu0 %403
    %v405 = vsub.f32 %v350, %v383
    %v406 = vsub.f32 %v353, %v386
    %v407 = vsub.f32 %v358, %v389
    %v408 = vsub.f32 %v361, %v392
    %v409 = vsub.f32 %v366, %v395
    %v410 = vsub.f32 %v369, %v398
    %v411 = vsub.f32 %v374, %v401
    %v412 = vsub.f32 %v377, %v404
    %v413 = vmul.f32 %v405, 1.442695
    %v414 = vpow.pop %v413
    %v415 = vmul.f32 %v406, 1.442695
    %v416 = vpow.pop %v415
    %v417 = vmul.f32 %v407, 1.442695
    %v418 = vpow.pop %v417
    %v419 = vmul.f32 %v408, 1.442695
    %v420 = vpow.pop %v419
    %v421 = vmul.f32 %v409, 1.442695
    %v422 = vpow.pop %v421
    %v423 = vmul.f32 %v410, 1.442695
    %v424 = vpow.pop %v423
    %v425 = vmul.f32 %v411, 1.442695
    %v426 = vpow.pop %v425
    %v427 = vmul.f32 %v412, 1.442695
    %v428 = vpow.pop %v427
    %v429 = vsel %vm380, %v414, 0.0
    %430 = vadd.xlane.f32.xlu0 %v429
    %v431 = vpop.xlane.xlu0 %430
    %v432 = vsel %vm380, %v416, 0.0
    %433 = vadd.xlane.f32.xlu0 %v432
    %v434 = vpop.xlane.xlu0 %433
    %v435 = vsel %vm380, %v418, 0.0
    %436 = vadd.xlane.f32.xlu0 %v435
    %v437 = vpop.xlane.xlu0 %436
    %v438 = vsel %vm380, %v420, 0.0
    %439 = vadd.xlane.f32.xlu0 %v438
    %v440 = vpop.xlane.xlu0 %439
    %v441 = vsel %vm380, %v422, 0.0
    %442 = vadd.xlane.f32.xlu0 %v441
    %v443 = vpop.xlane.xlu0 %442
    %v444 = vsel %vm380, %v424, 0.0
    %445 = vadd.xlane.f32.xlu0 %v444
    %v446 = vpop.xlane.xlu0 %445
    %v447 = vsel %vm380, %v426, 0.0
    %448 = vadd.xlane.f32.xlu0 %v447
    %v449 = vpop.xlane.xlu0 %448
    %v450 = vsel %vm380, %v428, 0.0
    %451 = vadd.xlane.f32.xlu0 %v450
    %v452 = vpop.xlane.xlu0 %451
    %v453 = vrcp.pop %v431
    %v454 = vrcp.pop %v434
    %v455 = vrcp.pop %v437
    %v456 = vrcp.pop %v440
    %v457 = vrcp.pop %v443
    %v458 = vrcp.pop %v446
    %v459 = vrcp.pop %v449
    %v460 = vrcp.pop %v452
    %v461 = vmul.f32 %v414, %v453
    %v462 = vmul.f32 %v416, %v454
    %v463 = vmul.f32 %v418, %v455
    %v464 = vmul.f32 %v420, %v456
    %v465 = vmul.f32 %v422, %v457
    %v466 = vmul.f32 %v424, %v458
    %v467 = vmul.f32 %v426, %v459
    %v468 = vmul.f32 %v428, %v460
    %v469 = vpack.c.bf16 %v462, %v461
    %v470 = vpack.c.bf16 %v464, %v463
    %v471 = vpack.c.bf16 %v466, %v465
    %v472 = vpack.c.bf16 %v468, %v467
    %473 = vrot.lane.b32.xlu0 %v274, 64
    %v474 = vpop.permute.xlu0 %473
    %475 = vrot.lane.b32.xlu0 %v275, 64
    %v476 = vpop.permute.xlu0 %475
    %477 = vrot.lane.b32.xlu0 %v276, 64
    %v478 = vpop.permute.xlu0 %477
    %479 = vrot.lane.b32.xlu0 %v277, 64
    %v480 = vpop.permute.xlu0 %479
    %v486 = vsel %vm380, %v469, 0
    %v489 = vsel %vm380, %v470, 0
    %v492 = vsel %vm380, %v471, 0
    %v495 = vsel %vm380, %v472, 0
    %497 = vmatprep.subr.bf16.mxu0 0
    %498 = vmatpush1.bf16.msra.mxu0 %v474
    %499 = vmatprep.subr.bf16.mxu0 0
    %500 = vmatpush1.bf16.msra.mxu0 %v476
    %501 = vmatprep.subr.bf16.mxu0 0
    %502 = vmatpush1.bf16.msra.mxu0 %v478
    %503 = vmatprep.subr.bf16.mxu0 0
    %504 = vmatpush1.bf16.msra.mxu0 %v480
    %505 = vmatprep.subr.bf16.mxu0 0
    %506 = vmatpush1.bf16.msra.mxu0 0
    %507 = vmatprep.subr.bf16.mxu0 0
    %508 = vmatpush1.bf16.msra.mxu0 0
    %509 = vmatprep.subr.bf16.mxu0 0
    %510 = vmatpush1.bf16.msra.mxu0 0
    %511 = vmatprep.subr.bf16.mxu0 0
    %512 = vmatpush1.bf16.msra.mxu0 0
    %513 = vmatprep.subr.bf16.mxu0 0
    %514 = vmatpush1.bf16.msra.mxu0 0
    %515 = vmatprep.subr.bf16.mxu0 0
    %516 = vmatpush1.bf16.msra.mxu0 0
    %517 = vmatprep.subr.bf16.mxu0 0
    %518 = vmatpush1.bf16.msra.mxu0 0
    %519 = vmatprep.subr.bf16.mxu0 0
    %520 = vmatpush1.bf16.msra.mxu0 0
    %521 = vmatprep.subr.bf16.mxu0 0
    %522 = vmatpush1.bf16.msra.mxu0 0
    %523 = vmatprep.subr.bf16.mxu0 0
    %524 = vmatpush1.bf16.msra.mxu0 0
    %525 = vmatprep.subr.bf16.mxu0 0
    %526 = vmatpush1.bf16.msra.mxu0 0
    %527 = vmatprep.subr.bf16.mxu0 0
    %528 = vmatpush1.bf16.msra.mxu0 0
    %529 = vmatprep.mubr.bf16.mxu0 0
    %530 = vmatmul.mubr.bf16.gmra.mrb[0].mxu0 %v486
    %v531 = vpop.f32.mrb[0].mxu0
    %v532 = vadd.f32 0.0, %v531
    %v533 = vpop.f32.mrb[0].mxu0
    %v534 = vpop.f32.mrb[0].mxu0
    %v535 = vadd.f32 0.0, %v534
    %v536 = vpop.f32.mrb[0].mxu0
    %537 = vmatprep.mubr.bf16.mxu0 0
    %538 = vmatmul.mubr.bf16.gmra.mrb[0].mxu0 %v489
    %v539 = vpop.f32.mrb[0].mxu0
    %v540 = vadd.f32 0.0, %v539
    %v541 = vpop.f32.mrb[0].mxu0
    %v542 = vpop.f32.mrb[0].mxu0
    %v543 = vadd.f32 0.0, %v542
    %v544 = vpop.f32.mrb[0].mxu0
    %545 = vmatprep.mubr.bf16.mxu0 0
    %546 = vmatmul.mubr.bf16.gmra.mrb[0].mxu0 %v492
    %v547 = vpop.f32.mrb[0].mxu0
    %v548 = vadd.f32 0.0, %v547
    %v549 = vpop.f32.mrb[0].mxu0
    %v550 = vpop.f32.mrb[0].mxu0
    %v551 = vadd.f32 0.0, %v550
    %v552 = vpop.f32.mrb[0].mxu0
    %553 = vmatprep.mubr.bf16.mxu0 0
    %554 = vmatmul.mubr.bf16.gmra.mrb[0].mxu0 %v495
    %v555 = vpop.f32.mrb[0].mxu0
    %v556 = vadd.f32 0.0, %v555
    %v557 = vpop.f32.mrb[0].mxu0
    %v558 = vpop.f32.mrb[0].mxu0
    %v559 = vadd.f32 0.0, %v558
    %v560 = vpop.f32.mrb[0].mxu0
    %561 = vdwg.mxu0
    %564 = vrot.lane.b32.xlu0 %v540, 8
    %v565 = vpop.permute.xlu0 %564
    %566 = vrot.lane.b32.xlu0 %v543, 8
    %v567 = vpop.permute.xlu0 %566
    %572 = vrot.lane.b32.xlu0 %v548, 16
    %v573 = vpop.permute.xlu0 %572
    %574 = vrot.lane.b32.xlu0 %v551, 16
    %v575 = vpop.permute.xlu0 %574
    %580 = vrot.lane.b32.xlu0 %v556, 24
    %v581 = vpop.permute.xlu0 %580
    %582 = vrot.lane.b32.xlu0 %v559, 24
    %v583 = vpop.permute.xlu0 %582
    %v586 = vsel %vm290, %v532, %v565
    %v587 = vsel %vm290, %v535, %v567
    %v588 = vsel %vm118, %v586, %v573
    %v589 = vsel %vm118, %v587, %v575
    %vm590 = vcmask 195584
    %v591 = vsel %vm590, %v588, %v581
    %v592 = vsel %vm590, %v589, %v583
    %v593 = vpack.c.bf16 %v592, %v591
    %v594 = vlaneseq
    %v595 = vshrl.u32 %v594, 7
    %v596 = vsub.s32 1, %v595
    %v597 = vrot.slane %v191, %v596
    %v602 = vunpack.c.l.b16 %v175
    %v603 = vunpack.c.l.b16 %v176
    %v604 = vunpack.c.l.b16 %v177
    %v605 = vunpack.c.l.b16 %v178
    %v606 = vpack.c.b16 %v603, %v602
    %v607 = vpack.c.b16 %v605, %v604
    %v611 = vsel %vm209, %v593, 0
    %613 = vmatprep.subr.bf16.mxu0 0
    %614 = vmatpush1.bf16.msra.mxu0 %v606
    %615 = vmatprep.subr.bf16.mxu0 0
    %616 = vmatpush1.bf16.msra.mxu0 %v607
    %617 = vmatprep.subr.bf16.mxu0 0
    %618 = vmatpush1.bf16.msra.mxu0 0
    %619 = vmatprep.subr.bf16.mxu0 0
    %620 = vmatpush1.bf16.msra.mxu0 0
    %621 = vmatprep.subr.bf16.mxu0 0
    %622 = vmatpush1.bf16.msra.mxu0 0
    %623 = vmatprep.subr.bf16.mxu0 0
    %624 = vmatpush1.bf16.msra.mxu0 0
    %625 = vmatprep.subr.bf16.mxu0 0
    %626 = vmatpush1.bf16.msra.mxu0 0
    %627 = vmatprep.subr.bf16.mxu0 0
    %628 = vmatpush1.bf16.msra.mxu0 0
    %629 = vmatprep.subr.bf16.mxu0 0
    %630 = vmatpush1.bf16.msra.mxu0 0
    %631 = vmatprep.subr.bf16.mxu0 0
    %632 = vmatpush1.bf16.msra.mxu0 0
    %633 = vmatprep.subr.bf16.mxu0 0
    %634 = vmatpush1.bf16.msra.mxu0 0
    %635 = vmatprep.subr.bf16.mxu0 0
    %636 = vmatpush1.bf16.msra.mxu0 0
    %637 = vmatprep.subr.bf16.mxu0 0
    %638 = vmatpush1.bf16.msra.mxu0 0
    %639 = vmatprep.subr.bf16.mxu0 0
    %640 = vmatpush1.bf16.msra.mxu0 0
    %641 = vmatprep.subr.bf16.mxu0 0
    %642 = vmatpush1.bf16.msra.mxu0 0
    %643 = vmatprep.subr.bf16.mxu0 0
    %644 = vmatpush1.bf16.msra.mxu0 0
    %645 = vmatprep.mubr.bf16.mxu0 0
    %646 = vmatmul.mubr.bf16.gmra.mrb[0].mxu0 %v611
    %v647 = vpop.f32.mrb[0].mxu0
    %v648 = vadd.f32 %v597, %v647
    %v649 = vpop.f32.mrb[0].mxu0
    %v650 = vpop.f32.mrb[0].mxu0
    %v651 = vadd.f32 %v597, %v650
    %v652 = vpop.f32.mrb[0].mxu0
    %653 = vdwg.mxu0
    %v654 = vadd.f32 %v157, %v648
    %v655 = vadd.f32 %v160, %v651
    %v656 = vsel %vm209, %v654, 0.0
    %657 = vadd.xlane.f32.xlu0 %v656
    %v658 = vpop.xlane.xlu0 %657
    %v659 = vsel %vm209, %v655, 0.0
    %660 = vadd.xlane.f32.xlu0 %v659
    %v661 = vpop.xlane.xlu0 %660
    %v662 = vrcp.pop 32.0
    %v663 = vmul.f32 %v658, %v662
    %v664 = vmul.f32 %v661, %v662
    %v665 = vsub.f32 %v654, %v663
    %v666 = vsub.f32 %v655, %v664
    %v667 = vmul.f32 %v665, %v665
    %v668 = vmul.f32 %v666, %v666
    %v669 = vsel %vm209, %v667, 0.0
    %670 = vadd.xlane.f32.xlu0 %v669
    %v671 = vpop.xlane.xlu0 %670
    %v672 = vsel %vm209, %v668, 0.0
    %673 = vadd.xlane.f32.xlu0 %v672
    %v674 = vpop.xlane.xlu0 %673
    %v675 = vmul.f32 %v671, %v662
    %v676 = vmul.f32 %v674, %v662
    %v677 = vadd.f32 %v675, 1e-05
    %v678 = vadd.f32 %v676, 1e-05
    %v679 = vrsqrt.pop %v677
    %v680 = vrsqrt.pop %v678
    %v681 = vmul.f32 %v665, %v679
    %v682 = vmul.f32 %v666, %v680
    %v683 = vlaneseq
    %v684 = vshrl.u32 %v683, 7
    %v685 = vsub.s32 4, %v684
    %v686 = vrot.slane %v191, %v685
    %v687 = vmul.f32 %v681, %v686
    %v688 = vmul.f32 %v682, %v686
    %v689 = vlaneseq
    %v690 = vshrl.u32 %v689, 7
    %v691 = vsub.s32 5, %v690
    %v692 = vrot.slane %v191, %v691
    %v693 = vadd.f32 %v687, %v692
    %v694 = vadd.f32 %v688, %v692
    %v695 = vpack.c.bf16 %v694, %v693
    %v696 = vlaneseq
    %v697 = vshrl.u32 %v696, 7
    %v698 = vsub.s32 2, %v697
    %v699 = vrot.slane %v191, %v698
    %v704 = vunpack.c.l.b16 %v179
    %v705 = vunpack.c.l.b16 %v180
    %v706 = vunpack.c.l.b16 %v181
    %v707 = vunpack.c.l.b16 %v182
    %v708 = vpack.c.b16 %v705, %v704
    %v709 = vpack.c.b16 %v707, %v706
    %v713 = vsel %vm209, %v695, 0
    %715 = vmatprep.subr.bf16.mxu0 0
    %716 = vmatpush1.bf16.msra.mxu0 %v708
    %717 = vmatprep.subr.bf16.mxu0 0
    %718 = vmatpush1.bf16.msra.mxu0 %v709
    %719 = vmatprep.subr.bf16.mxu0 0
    %720 = vmatpush1.bf16.msra.mxu0 0
    %721 = vmatprep.subr.bf16.mxu0 0
    %722 = vmatpush1.bf16.msra.mxu0 0
    %723 = vmatprep.subr.bf16.mxu0 0
    %724 = vmatpush1.bf16.msra.mxu0 0
    %725 = vmatprep.subr.bf16.mxu0 0
    %726 = vmatpush1.bf16.msra.mxu0 0
    %727 = vmatprep.subr.bf16.mxu0 0
    %728 = vmatpush1.bf16.msra.mxu0 0
    %729 = vmatprep.subr.bf16.mxu0 0
    %730 = vmatpush1.bf16.msra.mxu0 0
    %731 = vmatprep.subr.bf16.mxu0 0
    %732 = vmatpush1.bf16.msra.mxu0 0
    %733 = vmatprep.subr.bf16.mxu0 0
    %734 = vmatpush1.bf16.msra.mxu0 0
    %735 = vmatprep.subr.bf16.mxu0 0
    %736 = vmatpush1.bf16.msra.mxu0 0
    %737 = vmatprep.subr.bf16.mxu0 0
    %738 = vmatpush1.bf16.msra.mxu0 0
    %739 = vmatprep.subr.bf16.mxu0 0
    %740 = vmatpush1.bf16.msra.mxu0 0
    %741 = vmatprep.subr.bf16.mxu0 0
    %742 = vmatpush1.bf16.msra.mxu0 0
    %743 = vmatprep.subr.bf16.mxu0 0
    %744 = vmatpush1.bf16.msra.mxu0 0
    %745 = vmatprep.subr.bf16.mxu0 0
    %746 = vmatpush1.bf16.msra.mxu0 0
    %747 = vmatprep.mubr.bf16.mxu0 0
    %748 = vmatmul.mubr.bf16.gmra.mrb[0].mxu0 %v713
    %v749 = vpop.f32.mrb[0].mxu0
    %v750 = vadd.f32 %v699, %v749
    %v751 = vpop.f32.mrb[0].mxu0
    %v752 = vpop.f32.mrb[0].mxu0
    %v753 = vadd.f32 %v699, %v752
    %v754 = vpop.f32.mrb[0].mxu0
    %755 = vdwg.mxu0
    %v756 = vmax.f32 %v750, 0.0
    %v757 = vmax.f32 %v753, 0.0
    %v758 = vpack.c.bf16 %v757, %v756
    %v759 = vlaneseq
    %v760 = vshrl.u32 %v759, 7
    %v761 = vsub.s32 3, %v760
    %v762 = vrot.slane %v191, %v761
    %v771 = vunpack.c.l.b16 %v183
    %v772 = vunpack.c.l.b16 %v184
    %v773 = vunpack.c.l.b16 %v185
    %v774 = vunpack.c.l.b16 %v186
    %v775 = vunpack.c.l.b16 %v187
    %v776 = vunpack.c.l.b16 %v188
    %v777 = vunpack.c.l.b16 %v189
    %v778 = vunpack.c.l.b16 %v190
    %v779 = vpack.c.b16 %v772, %v771
    %v780 = vpack.c.b16 %v774, %v773
    %v781 = vpack.c.b16 %v776, %v775
    %v782 = vpack.c.b16 %v778, %v777
    %v788 = vsel %vm380, %v758, 0
    %790 = vmatprep.subr.bf16.mxu0 0
    %791 = vmatpush1.bf16.msra.mxu0 %v779
    %792 = vmatprep.subr.bf16.mxu0 0
    %793 = vmatpush1.bf16.msra.mxu0 %v780
    %794 = vmatprep.subr.bf16.mxu0 0
    %795 = vmatpush1.bf16.msra.mxu0 %v781
    %796 = vmatprep.subr.bf16.mxu0 0
    %797 = vmatpush1.bf16.msra.mxu0 %v782
    %798 = vmatprep.subr.bf16.mxu0 0
    %799 = vmatpush1.bf16.msra.mxu0 0
    %800 = vmatprep.subr.bf16.mxu0 0
    %801 = vmatpush1.bf16.msra.mxu0 0
    %802 = vmatprep.subr.bf16.mxu0 0
    %803 = vmatpush1.bf16.msra.mxu0 0
    %804 = vmatprep.subr.bf16.mxu0 0
    %805 = vmatpush1.bf16.msra.mxu0 0
    %806 = vmatprep.subr.bf16.mxu0 0
    %807 = vmatpush1.bf16.msra.mxu0 0
    %808 = vmatprep.subr.bf16.mxu0 0
    %809 = vmatpush1.bf16.msra.mxu0 0
    %810 = vmatprep.subr.bf16.mxu0 0
    %811 = vmatpush1.bf16.msra.mxu0 0
    %812 = vmatprep.subr.bf16.mxu0 0
    %813 = vmatpush1.bf16.msra.mxu0 0
    %814 = vmatprep.subr.bf16.mxu0 0
    %815 = vmatpush1.bf16.msra.mxu0 0
    %816 = vmatprep.subr.bf16.mxu0 0
    %817 = vmatpush1.bf16.msra.mxu0 0
    %818 = vmatprep.subr.bf16.mxu0 0
    %819 = vmatpush1.bf16.msra.mxu0 0
    %820 = vmatprep.subr.bf16.mxu0 0
    %821 = vmatpush1.bf16.msra.mxu0 0
    %822 = vmatprep.mubr.bf16.mxu0 0
    %823 = vmatmul.mubr.bf16.gmra.mrb[0].mxu0 %v788
    %v824 = vpop.f32.mrb[0].mxu0
    %v825 = vadd.f32 %v762, %v824
    %v826 = vpop.f32.mrb[0].mxu0
    %v827 = vpop.f32.mrb[0].mxu0
    %v828 = vadd.f32 %v762, %v827
    %v829 = vpop.f32.mrb[0].mxu0
    %830 = vdwg.mxu0
    %v831 = vadd.f32 %v693, %v825
    %v832 = vadd.f32 %v694, %v828
    %v833 = vsel %vm209, %v831, 0.0
    %834 = vadd.xlane.f32.xlu0 %v833
    %v835 = vpop.xlane.xlu0 %834
    %v836 = vsel %vm209, %v832, 0.0
    %837 = vadd.xlane.f32.xlu0 %v836
    %v838 = vpop.xlane.xlu0 %837
    %v839 = vmul.f32 %v835, %v662
    %v840 = vmul.f32 %v838, %v662
    %v841 = vsub.f32 %v831, %v839
    %v842 = vsub.f32 %v832, %v840
    %v843 = vmul.f32 %v841, %v841
    %v844 = vmul.f32 %v842, %v842
    %v845 = vsel %vm209, %v843, 0.0
    %846 = vadd.xlane.f32.xlu0 %v845
    %v847 = vpop.xlane.xlu0 %846
    %v848 = vsel %vm209, %v844, 0.0
    %849 = vadd.xlane.f32.xlu0 %v848
    %v850 = vpop.xlane.xlu0 %849
    %v851 = vmul.f32 %v847, %v662
    %v852 = vmul.f32 %v850, %v662
    %v853 = vadd.f32 %v851, 1e-05
    %v854 = vadd.f32 %v852, 1e-05
    %v855 = vrsqrt.pop %v853
    %v856 = vrsqrt.pop %v854
    %v857 = vmul.f32 %v841, %v855
    %v858 = vmul.f32 %v842, %v856
    %v859 = vlaneseq
    %v860 = vshrl.u32 %v859, 7
    %v861 = vsub.s32 6, %v860
    %v862 = vrot.slane %v191, %v861
    %v863 = vmul.f32 %v857, %v862
    %v864 = vmul.f32 %v858, %v862
    %v865 = vlaneseq
    %v866 = vshrl.u32 %v865, 7
    %v867 = vsub.s32 7, %v866
    %v868 = vrot.slane %v191, %v867
    %v869 = vadd.f32 %v863, %v868
    %v870 = vadd.f32 %v864, %v868
    %s871 = scalar_lea.vmem %s4, 16
    %v872 = vld [vmem:[%s871] sm:$0xf]
    %v873 = vld [vmem:[%s871 + $0x4] sm:$0xf]
    %v874 = vld [vmem:[%s871 + $0x8] sm:$0xf]
    %v875 = vld [vmem:[%s871 + $0xc] sm:$0xf]
    %s876 = scalar_lea.vmem [#allocation8], 16
    %v877 = vld [vmem:[%s876] sm:$0xf]
    %v878 = vld [vmem:[%s876 + $0x4] sm:$0xf]
    %v879 = vld [vmem:[%s876 + $0x8] sm:$0xf]
    %v880 = vld [vmem:[%s876 + $0xc] sm:$0xf]
    %s881 = scalar_lea.vmem [#allocation10], 16
    %v882 = vld [vmem:[%s881] sm:$0xf]
    %v883 = vld [vmem:[%s881 + $0x4] sm:$0xf]
    %v884 = vld [vmem:[%s881 + $0x8] sm:$0xf]
    %v885 = vld [vmem:[%s881 + $0xc] sm:$0xf]
    %s886 = scalar_lea.vmem %s7, 32
    %v887 = vld [vmem:[%s886] sm:$0xf]
    %v888 = vld [vmem:[%s886 + $0x4] sm:$0xf]
    %v889 = vld [vmem:[%s886 + $0x8] sm:$0xf]
    %v890 = vld [vmem:[%s886 + $0xc] sm:$0xf]
    %v891 = vld [vmem:[%s886 + $0x10] sm:$0xf]
    %v892 = vld [vmem:[%s886 + $0x14] sm:$0xf]
    %v893 = vld [vmem:[%s886 + $0x18] sm:$0xf]
    %v894 = vld [vmem:[%s886 + $0x1c] sm:$0xf]
    %s895 = scalar_lea.vmem %s8, 8
    %v896 = vld [vmem:[%s895] sm:$0xff]
    %v897 = vpack.c.bf16 %v870, %v869
    %v898 = vlaneseq
    %v899 = vshrl.u32 %v898, 7
    %v900 = vsub.s32 0, %v899
    %v901 = vrot.slane %v896, %v900
    %v906 = vunpack.c.l.b16 %v872
    %v907 = vunpack.c.l.b16 %v873
    %v908 = vunpack.c.l.b16 %v874
    %v909 = vunpack.c.l.b16 %v875
    %v910 = vpack.c.b16 %v907, %v906
    %v911 = vpack.c.b16 %v909, %v908
    %v915 = vsel %vm209, %v897, 0
    %917 = vmatprep.subr.bf16.mxu0 0
    %918 = vmatpush1.bf16.msra.mxu0 %v910
    %919 = vmatprep.subr.bf16.mxu0 0
    %920 = vmatpush1.bf16.msra.mxu0 %v911
    %921 = vmatprep.subr.bf16.mxu0 0
    %922 = vmatpush1.bf16.msra.mxu0 0
    %923 = vmatprep.subr.bf16.mxu0 0
    %924 = vmatpush1.bf16.msra.mxu0 0
    %925 = vmatprep.subr.bf16.mxu0 0
    %926 = vmatpush1.bf16.msra.mxu0 0
    %927 = vmatprep.subr.bf16.mxu0 0
    %928 = vmatpush1.bf16.msra.mxu0 0
    %929 = vmatprep.subr.bf16.mxu0 0
    %930 = vmatpush1.bf16.msra.mxu0 0
    %931 = vmatprep.subr.bf16.mxu0 0
    %932 = vmatpush1.bf16.msra.mxu0 0
    %933 = vmatprep.subr.bf16.mxu0 0
    %934 = vmatpush1.bf16.msra.mxu0 0
    %935 = vmatprep.subr.bf16.mxu0 0
    %936 = vmatpush1.bf16.msra.mxu0 0
    %937 = vmatprep.subr.bf16.mxu0 0
    %938 = vmatpush1.bf16.msra.mxu0 0
    %939 = vmatprep.subr.bf16.mxu0 0
    %940 = vmatpush1.bf16.msra.mxu0 0
    %941 = vmatprep.subr.bf16.mxu0 0
    %942 = vmatpush1.bf16.msra.mxu0 0
    %943 = vmatprep.subr.bf16.mxu0 0
    %944 = vmatpush1.bf16.msra.mxu0 0
    %945 = vmatprep.subr.bf16.mxu0 0
    %946 = vmatpush1.bf16.msra.mxu0 0
    %947 = vmatprep.subr.bf16.mxu0 0
    %948 = vmatpush1.bf16.msra.mxu0 0
    %949 = vmatprep.mubr.bf16.mxu0 0
    %950 = vmatmul.mubr.bf16.gmra.mrb[0].mxu0 %v915
    %v951 = vpop.f32.mrb[0].mxu0
    %v952 = vadd.f32 %v901, %v951
    %v953 = vpop.f32.mrb[0].mxu0
    %v954 = vpop.f32.mrb[0].mxu0
    %v955 = vadd.f32 %v901, %v954
    %v956 = vpop.f32.mrb[0].mxu0
    %957 = vdwg.mxu0
    %960 = vrot.lane.b32.xlu0 %v952, 120
    %v961 = vpop.permute.xlu0 %960
    %962 = vrot.lane.b32.xlu0 %v955, 120
    %v963 = vpop.permute.xlu0 %962
    %966 = vrot.lane.b32.xlu0 %v952, 112
    %v967 = vpop.permute.xlu0 %966
    %968 = vrot.lane.b32.xlu0 %v955, 112
    %v969 = vpop.permute.xlu0 %968
    %972 = vrot.lane.b32.xlu0 %v952, 104
    %v973 = vpop.permute.xlu0 %972
    %974 = vrot.lane.b32.xlu0 %v955, 104
    %v975 = vpop.permute.xlu0 %974
    %v978 = vpack.c.bf16 %v955, %v952
    %v979 = vpack.c.bf16 %v963, %v961
    %v980 = vpack.c.bf16 %v969, %v967
    %v981 = vpack.c.bf16 %v975, %v973
    %986 = vrot.lane.b32.xlu0 %v978, 96
    %v987 = vpop.permute.xlu0 %986
    %988 = vrot.lane.b32.xlu0 %v979, 96
    %v989 = vpop.permute.xlu0 %988
    %990 = vrot.lane.b32.xlu0 %v980, 96
    %v991 = vpop.permute.xlu0 %990
    %992 = vrot.lane.b32.xlu0 %v981, 96
    %v993 = vpop.permute.xlu0 %992
    %v995 = vsel %vm290, %v978, 0
    %v998 = vsel %vm290, %v979, 0
    %v1001 = vsel %vm290, %v980, 0
    %v1004 = vsel %vm290, %v981, 0
    %v1007 = vsel %vm290, %v987, 0
    %v1010 = vsel %vm290, %v989, 0
    %v1013 = vsel %vm290, %v991, 0
    %v1016 = vsel %vm290, %v993, 0
    %1018 = vmatprep.subr.bf16.mxu0 0
    %1019 = vmatpush1.bf16.xpose.msra.mxu0 %v1007
    %1020 = vmatprep.subr.bf16.mxu0 0
    %1021 = vmatpush1.bf16.xpose.msra.mxu0 %v1010
    %1022 = vmatprep.subr.bf16.mxu0 0
    %1023 = vmatpush1.bf16.xpose.msra.mxu0 %v1013
    %1024 = vmatprep.subr.bf16.mxu0 0
    %1025 = vmatpush1.bf16.xpose.msra.mxu0 %v1016
    %1026 = vmatprep.subr.bf16.mxu0 0
    %1027 = vmatpush1.bf16.xpose.msra.mxu0 0
    %1028 = vmatprep.subr.bf16.mxu0 0
    %1029 = vmatpush1.bf16.xpose.msra.mxu0 0
    %1030 = vmatprep.subr.bf16.mxu0 0
    %1031 = vmatpush1.bf16.xpose.msra.mxu0 0
    %1032 = vmatprep.subr.bf16.mxu0 0
    %1033 = vmatpush1.bf16.xpose.msra.mxu0 0
    %1034 = vmatprep.subr.bf16.mxu0 0
    %1035 = vmatpush1.bf16.xpose.msra.mxu0 0
    %1036 = vmatprep.subr.bf16.mxu0 0
    %1037 = vmatpush1.bf16.xpose.msra.mxu0 0
    %1038 = vmatprep.subr.bf16.mxu0 0
    %1039 = vmatpush1.bf16.xpose.msra.mxu0 0
    %1040 = vmatprep.subr.bf16.mxu0 0
    %1041 = vmatpush1.bf16.xpose.msra.mxu0 0
    %1042 = vmatprep.subr.bf16.mxu0 0
    %1043 = vmatpush1.bf16.xpose.msra.mxu0 0
    %1044 = vmatprep.subr.bf16.mxu0 0
    %1045 = vmatpush1.bf16.xpose.msra.mxu0 0
    %1046 = vmatprep.subr.bf16.mxu0 0
    %1047 = vmatpush1.bf16.xpose.msra.mxu0 0
    %1048 = vmatprep.subr.bf16.mxu0 0
    %1049 = vmatpush1.bf16.xpose.msra.mxu0 0
    %1050 = vmatprep.mubr.bf16.mxu0 0
    %1051 = vmatmul.mubr.bf16.gmra.mrb[0].mxu0 %v995
    %v1052 = vpop.f32.mrb[0].mxu0
    %v1053 = vadd.f32 %v163, %v1052
    %v1054 = vpop.f32.mrb[0].mxu0
    %v1055 = vpop.f32.mrb[0].mxu0
    %v1056 = vadd.f32 %v164, %v1055
    %v1057 = vpop.f32.mrb[0].mxu0
    %1058 = vmatprep.mubr.bf16.mxu0 0
    %1059 = vmatmul.mubr.bf16.gmra.mrb[0].mxu0 %v998
    %v1060 = vpop.f32.mrb[0].mxu0
    %v1061 = vadd.f32 %v165, %v1060
    %v1062 = vpop.f32.mrb[0].mxu0
    %v1063 = vpop.f32.mrb[0].mxu0
    %v1064 = vadd.f32 %v166, %v1063
    %v1065 = vpop.f32.mrb[0].mxu0
    %1066 = vmatprep.mubr.bf16.mxu0 0
    %1067 = vmatmul.mubr.bf16.gmra.mrb[0].mxu0 %v1001
    %v1068 = vpop.f32.mrb[0].mxu0
    %v1069 = vadd.f32 %v167, %v1068
    %v1070 = vpop.f32.mrb[0].mxu0
    %v1071 = vpop.f32.mrb[0].mxu0
    %v1072 = vadd.f32 %v168, %v1071
    %v1073 = vpop.f32.mrb[0].mxu0
    %1074 = vmatprep.mubr.bf16.mxu0 0
    %1075 = vmatmul.mubr.bf16.gmra.mrb[0].mxu0 %v1004
    %v1076 = vpop.f32.mrb[0].mxu0
    %v1077 = vadd.f32 %v169, %v1076
    %v1078 = vpop.f32.mrb[0].mxu0
    %v1079 = vpop.f32.mrb[0].mxu0
    %v1080 = vadd.f32 %v170, %v1079
    %v1081 = vpop.f32.mrb[0].mxu0
    %1082 = vdwg.mxu0
    %v1083 = vsel %vm380, %v1053, -inf
    %1084 = vmax.xlane.f32.xlu0 %v1083
    %v1085 = vpop.xlane.xlu0 %1084
    %v1086 = vsel %vm380, %v1056, -inf
    %1087 = vmax.xlane.f32.xlu0 %v1086
    %v1088 = vpop.xlane.xlu0 %1087
    %v1089 = vsel %vm380, %v1061, -inf
    %1090 = vmax.xlane.f32.xlu0 %v1089
    %v1091 = vpop.xlane.xlu0 %1090
    %v1092 = vsel %vm380, %v1064, -inf
    %1093 = vmax.xlane.f32.xlu0 %v1092
    %v1094 = vpop.xlane.xlu0 %1093
    %v1095 = vsel %vm380, %v1069, -inf
    %1096 = vmax.xlane.f32.xlu0 %v1095
    %v1097 = vpop.xlane.xlu0 %1096
    %v1098 = vsel %vm380, %v1072, -inf
    %1099 = vmax.xlane.f32.xlu0 %v1098
    %v1100 = vpop.xlane.xlu0 %1099
    %v1101 = vsel %vm380, %v1077, -inf
    %1102 = vmax.xlane.f32.xlu0 %v1101
    %v1103 = vpop.xlane.xlu0 %1102
    %v1104 = vsel %vm380, %v1080, -inf
    %1105 = vmax.xlane.f32.xlu0 %v1104
    %v1106 = vpop.xlane.xlu0 %1105
    %v1107 = vsub.f32 %v1053, %v1085
    %v1108 = vsub.f32 %v1056, %v1088
    %v1109 = vsub.f32 %v1061, %v1091
    %v1110 = vsub.f32 %v1064, %v1094
    %v1111 = vsub.f32 %v1069, %v1097
    %v1112 = vsub.f32 %v1072, %v1100
    %v1113 = vsub.f32 %v1077, %v1103
    %v1114 = vsub.f32 %v1080, %v1106
    %v1115 = vmul.f32 %v1107, 1.442695
    %v1116 = vpow.pop %v1115
    %v1117 = vmul.f32 %v1108, 1.442695
    %v1118 = vpow.pop %v1117
    %v1119 = vmul.f32 %v1109, 1.442695
    %v1120 = vpow.pop %v1119
    %v1121 = vmul.f32 %v1110, 1.442695
    %v1122 = vpow.pop %v1121
    %v1123 = vmul.f32 %v1111, 1.442695
    %v1124 = vpow.pop %v1123
    %v1125 = vmul.f32 %v1112, 1.442695
    %v1126 = vpow.pop %v1125
    %v1127 = vmul.f32 %v1113, 1.442695
    %v1128 = vpow.pop %v1127
    %v1129 = vmul.f32 %v1114, 1.442695
    %v1130 = vpow.pop %v1129
    %v1131 = vsel %vm380, %v1116, 0.0
    %1132 = vadd.xlane.f32.xlu0 %v1131
    %v1133 = vpop.xlane.xlu0 %1132
    %v1134 = vsel %vm380, %v1118, 0.0
    %1135 = vadd.xlane.f32.xlu0 %v1134
    %v1136 = vpop.xlane.xlu0 %1135
    %v1137 = vsel %vm380, %v1120, 0.0
    %1138 = vadd.xlane.f32.xlu0 %v1137
    %v1139 = vpop.xlane.xlu0 %1138
    %v1140 = vsel %vm380, %v1122, 0.0
    %1141 = vadd.xlane.f32.xlu0 %v1140
    %v1142 = vpop.xlane.xlu0 %1141
    %v1143 = vsel %vm380, %v1124, 0.0
    %1144 = vadd.xlane.f32.xlu0 %v1143
    %v1145 = vpop.xlane.xlu0 %1144
    %v1146 = vsel %vm380, %v1126, 0.0
    %1147 = vadd.xlane.f32.xlu0 %v1146
    %v1148 = vpop.xlane.xlu0 %1147
    %v1149 = vsel %vm380, %v1128, 0.0
    %1150 = vadd.xlane.f32.xlu0 %v1149
    %v1151 = vpop.xlane.xlu0 %1150
    %v1152 = vsel %vm380, %v1130, 0.0
    %1153 = vadd.xlane.f32.xlu0 %v1152
    %v1154 = vpop.xlane.xlu0 %1153
    %v1155 = vrcp.pop %v1133
    %v1156 = vrcp.pop %v1136
    %v1157 = vrcp.pop %v1139
    %v1158 = vrcp.pop %v1142
    %v1159 = vrcp.pop %v1145
    %v1160 = vrcp.pop %v1148
    %v1161 = vrcp.pop %v1151
    %v1162 = vrcp.pop %v1154
    %v1163 = vmul.f32 %v1116, %v1155
    %v1164 = vmul.f32 %v1118, %v1156
    %v1165 = vmul.f32 %v1120, %v1157
    %v1166 = vmul.f32 %v1122, %v1158
    %v1167 = vmul.f32 %v1124, %v1159
    %v1168 = vmul.f32 %v1126, %v1160
    %v1169 = vmul.f32 %v1128, %v1161
    %v1170 = vmul.f32 %v1130, %v1162
    %v1171 = vpack.c.bf16 %v1164, %v1163
    %v1172 = vpack.c.bf16 %v1166, %v1165
    %v1173 = vpack.c.bf16 %v1168, %v1167
    %v1174 = vpack.c.bf16 %v1170, %v1169
    %1175 = vrot.lane.b32.xlu0 %v978, 64
    %v1176 = vpop.permute.xlu0 %1175
    %1177 = vrot.lane.b32.xlu0 %v979, 64
    %v1178 = vpop.permute.xlu0 %1177
    %1179 = vrot.lane.b32.xlu0 %v980, 64
    %v1180 = vpop.permute.xlu0 %1179
    %1181 = vrot.lane.b32.xlu0 %v981, 64
    %v1182 = vpop.permute.xlu0 %1181
    %v1188 = vsel %vm380, %v1171, 0
    %v1191 = vsel %vm380, %v1172, 0
    %v1194 = vsel %vm380, %v1173, 0
    %v1197 = vsel %vm380, %v1174, 0
    %1199 = vmatprep.subr.bf16.mxu0 0
    %1200 = vmatpush1.bf16.msra.mxu0 %v1176
    %1201 = vmatprep.subr.bf16.mxu0 0
    %1202 = vmatpush1.bf16.msra.mxu0 %v1178
    %1203 = vmatprep.subr.bf16.mxu0 0
    %1204 = vmatpush1.bf16.msra.mxu0 %v1180
    %1205 = vmatprep.subr.bf16.mxu0 0
    %1206 = vmatpush1.bf16.msra.mxu0 %v1182
    %1207 = vmatprep.subr.bf16.mxu0 0
    %1208 = vmatpush1.bf16.msra.mxu0 0
    %1209 = vmatprep.subr.bf16.mxu0 0
    %1210 = vmatpush1.bf16.msra.mxu0 0
    %1211 = vmatprep.subr.bf16.mxu0 0
    %1212 = vmatpush1.bf16.msra.mxu0 0
    %1213 = vmatprep.subr.bf16.mxu0 0
    %1214 = vmatpush1.bf16.msra.mxu0 0
    %1215 = vmatprep.subr.bf16.mxu0 0
    %1216 = vmatpush1.bf16.msra.mxu0 0
    %1217 = vmatprep.subr.bf16.mxu0 0
    %1218 = vmatpush1.bf16.msra.mxu0 0
    %1219 = vmatprep.subr.bf16.mxu0 0
    %1220 = vmatpush1.bf16.msra.mxu0 0
    %1221 = vmatprep.subr.bf16.mxu0 0
    %1222 = vmatpush1.bf16.msra.mxu0 0
    %1223 = vmatprep.subr.bf16.mxu0 0
    %1224 = vmatpush1.bf16.msra.mxu0 0
    %1225 = vmatprep.subr.bf16.mxu0 0
    %1226 = vmatpush1.bf16.msra.mxu0 0
    %1227 = vmatprep.subr.bf16.mxu0 0
    %1228 = vmatpush1.bf16.msra.mxu0 0
    %1229 = vmatprep.subr.bf16.mxu0 0
    %1230 = vmatpush1.bf16.msra.mxu0 0
    %1231 = vmatprep.mubr.bf16.mxu0 0
    %1232 = vmatmul.mubr.bf16.gmra.mrb[0].mxu0 %v1188
    %v1233 = vpop.f32.mrb[0].mxu0
    %v1234 = vadd.f32 0.0, %v1233
    %v1235 = vpop.f32.mrb[0].mxu0
    %v1236 = vpop.f32.mrb[0].mxu0
    %v1237 = vadd.f32 0.0, %v1236
    %v1238 = vpop.f32.mrb[0].mxu0
    %1239 = vmatprep.mubr.bf16.mxu0 0
    %1240 = vmatmul.mubr.bf16.gmra.mrb[0].mxu0 %v1191
    %v1241 = vpop.f32.mrb[0].mxu0
    %v1242 = vadd.f32 0.0, %v1241
    %v1243 = vpop.f32.mrb[0].mxu0
    %v1244 = vpop.f32.mrb[0].mxu0
    %v1245 = vadd.f32 0.0, %v1244
    %v1246 = vpop.f32.mrb[0].mxu0
    %1247 = vmatprep.mubr.bf16.mxu0 0
    %1248 = vmatmul.mubr.bf16.gmra.mrb[0].mxu0 %v1194
    %v1249 = vpop.f32.mrb[0].mxu0
    %v1250 = vadd.f32 0.0, %v1249
    %v1251 = vpop.f32.mrb[0].mxu0
    %v1252 = vpop.f32.mrb[0].mxu0
    %v1253 = vadd.f32 0.0, %v1252
    %v1254 = vpop.f32.mrb[0].mxu0
    %1255 = vmatprep.mubr.bf16.mxu0 0
    %1256 = vmatmul.mubr.bf16.gmra.mrb[0].mxu0 %v1197
    %v1257 = vpop.f32.mrb[0].mxu0
    %v1258 = vadd.f32 0.0, %v1257
    %v1259 = vpop.f32.mrb[0].mxu0
    %v1260 = vpop.f32.mrb[0].mxu0
    %v1261 = vadd.f32 0.0, %v1260
    %v1262 = vpop.f32.mrb[0].mxu0
    %1263 = vdwg.mxu0
    %1266 = vrot.lane.b32.xlu0 %v1242, 8
    %v1267 = vpop.permute.xlu0 %1266
    %1268 = vrot.lane.b32.xlu0 %v1245, 8
    %v1269 = vpop.permute.xlu0 %1268
    %1274 = vrot.lane.b32.xlu0 %v1250, 16
    %v1275 = vpop.permute.xlu0 %1274
    %1276 = vrot.lane.b32.xlu0 %v1253, 16
    %v1277 = vpop.permute.xlu0 %1276
    %1282 = vrot.lane.b32.xlu0 %v1258, 24
    %v1283 = vpop.permute.xlu0 %1282
    %1284 = vrot.lane.b32.xlu0 %v1261, 24
    %v1285 = vpop.permute.xlu0 %1284
    %v1288 = vsel %vm290, %v1234, %v1267
    %v1289 = vsel %vm290, %v1237, %v1269
    %v1290 = vsel %vm118, %v1288, %v1275
    %v1291 = vsel %vm118, %v1289, %v1277
    %v1292 = vsel %vm590, %v1290, %v1283
    %v1293 = vsel %vm590, %v1291, %v1285
    %v1294 = vpack.c.bf16 %v1293, %v1292
    %v1295 = vlaneseq
    %v1296 = vshrl.u32 %v1295, 7
    %v1297 = vsub.s32 1, %v1296
    %v1298 = vrot.slane %v896, %v1297
    %v1303 = vunpack.c.l.b16 %v877
    %v1304 = vunpack.c.l.b16 %v878
    %v1305 = vunpack.c.l.b16 %v879
    %v1306 = vunpack.c.l.b16 %v880
    %v1307 = vpack.c.b16 %v1304, %v1303
    %v1308 = vpack.c.b16 %v1306, %v1305
    %v1312 = vsel %vm209, %v1294, 0
    %1314 = vmatprep.subr.bf16.mxu0 0
    %1315 = vmatpush1.bf16.msra.mxu0 %v1307
    %1316 = vmatprep.subr.bf16.mxu0 0
    %1317 = vmatpush1.bf16.msra.mxu0 %v1308
    %1318 = vmatprep.subr.bf16.mxu0 0
    %1319 = vmatpush1.bf16.msra.mxu0 0
    %1320 = vmatprep.subr.bf16.mxu0 0
    %1321 = vmatpush1.bf16.msra.mxu0 0
    %1322 = vmatprep.subr.bf16.mxu0 0
    %1323 = vmatpush1.bf16.msra.mxu0 0
    %1324 = vmatprep.subr.bf16.mxu0 0
    %1325 = vmatpush1.bf16.msra.mxu0 0
    %1326 = vmatprep.subr.bf16.mxu0 0
    %1327 = vmatpush1.bf16.msra.mxu0 0
    %1328 = vmatprep.subr.bf16.mxu0 0
    %1329 = vmatpush1.bf16.msra.mxu0 0
    %1330 = vmatprep.subr.bf16.mxu0 0
    %1331 = vmatpush1.bf16.msra.mxu0 0
    %1332 = vmatprep.subr.bf16.mxu0 0
    %1333 = vmatpush1.bf16.msra.mxu0 0
    %1334 = vmatprep.subr.bf16.mxu0 0
    %1335 = vmatpush1.bf16.msra.mxu0 0
    %1336 = vmatprep.subr.bf16.mxu0 0
    %1337 = vmatpush1.bf16.msra.mxu0 0
    %1338 = vmatprep.subr.bf16.mxu0 0
    %1339 = vmatpush1.bf16.msra.mxu0 0
    %1340 = vmatprep.subr.bf16.mxu0 0
    %1341 = vmatpush1.bf16.msra.mxu0 0
    %1342 = vmatprep.subr.bf16.mxu0 0
    %1343 = vmatpush1.bf16.msra.mxu0 0
    %1344 = vmatprep.subr.bf16.mxu0 0
    %1345 = vmatpush1.bf16.msra.mxu0 0
    %1346 = vmatprep.mubr.bf16.mxu0 0
    %1347 = vmatmul.mubr.bf16.gmra.mrb[0].mxu0 %v1312
    %v1348 = vpop.f32.mrb[0].mxu0
    %v1349 = vadd.f32 %v1298, %v1348
    %v1350 = vpop.f32.mrb[0].mxu0
    %v1351 = vpop.f32.mrb[0].mxu0
    %v1352 = vadd.f32 %v1298, %v1351
    %v1353 = vpop.f32.mrb[0].mxu0
    %1354 = vdwg.mxu0
    %v1355 = vadd.f32 %v869, %v1349
    %v1356 = vadd.f32 %v870, %v1352
    %v1357 = vsel %vm209, %v1355, 0.0
    %1358 = vadd.xlane.f32.xlu0 %v1357
    %v1359 = vpop.xlane.xlu0 %1358
    %v1360 = vsel %vm209, %v1356, 0.0
    %1361 = vadd.xlane.f32.xlu0 %v1360
    %v1362 = vpop.xlane.xlu0 %1361
    %v1363 = vmul.f32 %v1359, %v662
    %v1364 = vmul.f32 %v1362, %v662
    %v1365 = vsub.f32 %v1355, %v1363
    %v1366 = vsub.f32 %v1356, %v1364
    %v1367 = vmul.f32 %v1365, %v1365
    %v1368 = vmul.f32 %v1366, %v1366
    %v1369 = vsel %vm209, %v1367, 0.0
    %1370 = vadd.xlane.f32.xlu0 %v1369
    %v1371 = vpop.xlane.xlu0 %1370
    %v1372 = vsel %vm209, %v1368, 0.0
    %1373 = vadd.xlane.f32.xlu0 %v1372
    %v1374 = vpop.xlane.xlu0 %1373
    %v1375 = vmul.f32 %v1371, %v662
    %v1376 = vmul.f32 %v1374, %v662
    %v1377 = vadd.f32 %v1375, 1e-05
    %v1378 = vadd.f32 %v1376, 1e-05
    %v1379 = vrsqrt.pop %v1377
    %v1380 = vrsqrt.pop %v1378
    %v1381 = vmul.f32 %v1365, %v1379
    %v1382 = vmul.f32 %v1366, %v1380
    %v1383 = vlaneseq
    %v1384 = vshrl.u32 %v1383, 7
    %v1385 = vsub.s32 4, %v1384
    %v1386 = vrot.slane %v896, %v1385
    %v1387 = vmul.f32 %v1381, %v1386
    %v1388 = vmul.f32 %v1382, %v1386
    %v1389 = vlaneseq
    %v1390 = vshrl.u32 %v1389, 7
    %v1391 = vsub.s32 5, %v1390
    %v1392 = vrot.slane %v896, %v1391
    %v1393 = vadd.f32 %v1387, %v1392
    %v1394 = vadd.f32 %v1388, %v1392
    %v1395 = vpack.c.bf16 %v1394, %v1393
    %v1396 = vlaneseq
    %v1397 = vshrl.u32 %v1396, 7
    %v1398 = vsub.s32 2, %v1397
    %v1399 = vrot.slane %v896, %v1398
    %v1404 = vunpack.c.l.b16 %v882
    %v1405 = vunpack.c.l.b16 %v883
    %v1406 = vunpack.c.l.b16 %v884
    %v1407 = vunpack.c.l.b16 %v885
    %v1408 = vpack.c.b16 %v1405, %v1404
    %v1409 = vpack.c.b16 %v1407, %v1406
    %v1413 = vsel %vm209, %v1395, 0
    %1415 = vmatprep.subr.bf16.mxu0 0
    %1416 = vmatpush1.bf16.msra.mxu0 %v1408
    %1417 = vmatprep.subr.bf16.mxu0 0
    %1418 = vmatpush1.bf16.msra.mxu0 %v1409
    %1419 = vmatprep.subr.bf16.mxu0 0
    %1420 = vmatpush1.bf16.msra.mxu0 0
    %1421 = vmatprep.subr.bf16.mxu0 0
    %1422 = vmatpush1.bf16.msra.mxu0 0
    %1423 = vmatprep.subr.bf16.mxu0 0
    %1424 = vmatpush1.bf16.msra.mxu0 0
    %1425 = vmatprep.subr.bf16.mxu0 0
    %1426 = vmatpush1.bf16.msra.mxu0 0
    %1427 = vmatprep.subr.bf16.mxu0 0
    %1428 = vmatpush1.bf16.msra.mxu0 0
    %1429 = vmatprep.subr.bf16.mxu0 0
    %1430 = vmatpush1.bf16.msra.mxu0 0
    %1431 = vmatprep.subr.bf16.mxu0 0
    %1432 = vmatpush1.bf16.msra.mxu0 0
    %1433 = vmatprep.subr.bf16.mxu0 0
    %1434 = vmatpush1.bf16.msra.mxu0 0
    %1435 = vmatprep.subr.bf16.mxu0 0
    %1436 = vmatpush1.bf16.msra.mxu0 0
    %1437 = vmatprep.subr.bf16.mxu0 0
    %1438 = vmatpush1.bf16.msra.mxu0 0
    %1439 = vmatprep.subr.bf16.mxu0 0
    %1440 = vmatpush1.bf16.msra.mxu0 0
    %1441 = vmatprep.subr.bf16.mxu0 0
    %1442 = vmatpush1.bf16.msra.mxu0 0
    %1443 = vmatprep.subr.bf16.mxu0 0
    %1444 = vmatpush1.bf16.msra.mxu0 0
    %1445 = vmatprep.subr.bf16.mxu0 0
    %1446 = vmatpush1.bf16.msra.mxu0 0
    %1447 = vmatprep.mubr.bf16.mxu0 0
    %1448 = vmatmul.mubr.bf16.gmra.mrb[0].mxu0 %v1413
    %v1449 = vpop.f32.mrb[0].mxu0
    %v1450 = vadd.f32 %v1399, %v1449
    %v1451 = vpop.f32.mrb[0].mxu0
    %v1452 = vpop.f32.mrb[0].mxu0
    %v1453 = vadd.f32 %v1399, %v1452
    %v1454 = vpop.f32.mrb[0].mxu0
    %1455 = vdwg.mxu0
    %v1456 = vmax.f32 %v1450, 0.0
    %v1457 = vmax.f32 %v1453, 0.0
    %v1458 = vpack.c.bf16 %v1457, %v1456
    %v1459 = vlaneseq
    %v1460 = vshrl.u32 %v1459, 7
    %v1461 = vsub.s32 3, %v1460
    %v1462 = vrot.slane %v896, %v1461
    %v1471 = vunpack.c.l.b16 %v887
    %v1472 = vunpack.c.l.b16 %v888
    %v1473 = vunpack.c.l.b16 %v889
    %v1474 = vunpack.c.l.b16 %v890
    %v1475 = vunpack.c.l.b16 %v891
    %v1476 = vunpack.c.l.b16 %v892
    %v1477 = vunpack.c.l.b16 %v893
    %v1478 = vunpack.c.l.b16 %v894
    %v1479 = vpack.c.b16 %v1472, %v1471
    %v1480 = vpack.c.b16 %v1474, %v1473
    %v1481 = vpack.c.b16 %v1476, %v1475
    %v1482 = vpack.c.b16 %v1478, %v1477
    %v1488 = vsel %vm380, %v1458, 0
    %1490 = vmatprep.subr.bf16.mxu0 0
    %1491 = vmatpush1.bf16.msra.mxu0 %v1479
    %1492 = vmatprep.subr.bf16.mxu0 0
    %1493 = vmatpush1.bf16.msra.mxu0 %v1480
    %1494 = vmatprep.subr.bf16.mxu0 0
    %1495 = vmatpush1.bf16.msra.mxu0 %v1481
    %1496 = vmatprep.subr.bf16.mxu0 0
    %1497 = vmatpush1.bf16.msra.mxu0 %v1482
    %1498 = vmatprep.subr.bf16.mxu0 0
    %1499 = vmatpush1.bf16.msra.mxu0 0
    %1500 = vmatprep.subr.bf16.mxu0 0
    %1501 = vmatpush1.bf16.msra.mxu0 0
    %1502 = vmatprep.subr.bf16.mxu0 0
    %1503 = vmatpush1.bf16.msra.mxu0 0
    %1504 = vmatprep.subr.bf16.mxu0 0
    %1505 = vmatpush1.bf16.msra.mxu0 0
    %1506 = vmatprep.subr.bf16.mxu0 0
    %1507 = vmatpush1.bf16.msra.mxu0 0
    %1508 = vmatprep.subr.bf16.mxu0 0
    %1509 = vmatpush1.bf16.msra.mxu0 0
    %1510 = vmatprep.subr.bf16.mxu0 0
    %1511 = vmatpush1.bf16.msra.mxu0 0
    %1512 = vmatprep.subr.bf16.mxu0 0
    %1513 = vmatpush1.bf16.msra.mxu0 0
    %1514 = vmatprep.subr.bf16.mxu0 0
    %1515 = vmatpush1.bf16.msra.mxu0 0
    %1516 = vmatprep.subr.bf16.mxu0 0
    %1517 = vmatpush1.bf16.msra.mxu0 0
    %1518 = vmatprep.subr.bf16.mxu0 0
    %1519 = vmatpush1.bf16.msra.mxu0 0
    %1520 = vmatprep.subr.bf16.mxu0 0
    %1521 = vmatpush1.bf16.msra.mxu0 0
    %1522 = vmatprep.mubr.bf16.mxu0 0
    %1523 = vmatmul.mubr.bf16.gmra.mrb[0].mxu0 %v1488
    %v1524 = vpop.f32.mrb[0].mxu0
    %v1525 = vadd.f32 %v1462, %v1524
    %v1526 = vpop.f32.mrb[0].mxu0
    %v1527 = vpop.f32.mrb[0].mxu0
    %v1528 = vadd.f32 %v1462, %v1527
    %v1529 = vpop.f32.mrb[0].mxu0
    %1530 = vdwg.mxu0
    %v1531 = vadd.f32 %v1393, %v1525
    %v1532 = vadd.f32 %v1394, %v1528
    %v1533 = vsel %vm209, %v1531, 0.0
    %1534 = vadd.xlane.f32.xlu0 %v1533
    %v1535 = vpop.xlane.xlu0 %1534
    %v1536 = vsel %vm209, %v1532, 0.0
    %1537 = vadd.xlane.f32.xlu0 %v1536
    %v1538 = vpop.xlane.xlu0 %1537
    %v1539 = vmul.f32 %v1535, %v662
    %v1540 = vmul.f32 %v1538, %v662
    %v1541 = vsub.f32 %v1531, %v1539
    %v1542 = vsub.f32 %v1532, %v1540
    %v1543 = vmul.f32 %v1541, %v1541
    %v1544 = vmul.f32 %v1542, %v1542
    %v1545 = vsel %vm209, %v1543, 0.0
    %1546 = vadd.xlane.f32.xlu0 %v1545
    %v1547 = vpop.xlane.xlu0 %1546
    %v1548 = vsel %vm209, %v1544, 0.0
    %1549 = vadd.xlane.f32.xlu0 %v1548
    %v1550 = vpop.xlane.xlu0 %1549
    %v1551 = vmul.f32 %v1547, %v662
    %v1552 = vmul.f32 %v1550, %v662
    %v1553 = vadd.f32 %v1551, 1e-05
    %v1554 = vadd.f32 %v1552, 1e-05
    %v1555 = vrsqrt.pop %v1553
    %v1556 = vrsqrt.pop %v1554
    %v1557 = vmul.f32 %v1541, %v1555
    %v1558 = vmul.f32 %v1542, %v1556
    %v1559 = vlaneseq
    %v1560 = vshrl.u32 %v1559, 7
    %v1561 = vsub.s32 6, %v1560
    %v1562 = vrot.slane %v896, %v1561
    %v1563 = vmul.f32 %v1557, %v1562
    %v1564 = vmul.f32 %v1558, %v1562
    %v1565 = vlaneseq
    %v1566 = vshrl.u32 %v1565, 7
    %v1567 = vsub.s32 7, %v1566
    %v1568 = vrot.slane %v896, %v1567
    %v1569 = vadd.f32 %v1563, %v1568
    %v1570 = vadd.f32 %v1564, %v1568
    %v1571 = vld [vmem:[%s9] sm:$0x3]
    %v1572 = vsel %vm209, %v1569, 0.0
    %1573 = vadd.xlane.f32.xlu0 %v1572
    %v1574 = vpop.xlane.xlu0 %1573
    %v1575 = vsel %vm209, %v1570, 0.0
    %1576 = vadd.xlane.f32.xlu0 %v1575
    %v1577 = vpop.xlane.xlu0 %1576
    %v1578 = vmul.f32 %v1574, %v662
    %v1579 = vmul.f32 %v1577, %v662
    %v1580 = vsub.f32 %v1569, %v1578
    %v1581 = vsub.f32 %v1570, %v1579
    %v1582 = vmul.f32 %v1580, %v1580
    %v1583 = vmul.f32 %v1581, %v1581
    %v1584 = vsel %vm209, %v1582, 0.0
    %1585 = vadd.xlane.f32.xlu0 %v1584
    %v1586 = vpop.xlane.xlu0 %1585
    %v1587 = vsel %vm209, %v1583, 0.0
    %1588 = vadd.xlane.f32.xlu0 %v1587
    %v1589 = vpop.xlane.xlu0 %1588
    %v1590 = vmul.f32 %v1586, %v662
    %v1591 = vmul.f32 %v1589, %v662
    %v1592 = vadd.f32 %v1590, 1e-05
    %v1593 = vadd.f32 %v1591, 1e-05
    %v1594 = vrsqrt.pop %v1592
    %v1595 = vrsqrt.pop %v1593
    %v1596 = vmul.f32 %v1580, %v1594
    %v1597 = vmul.f32 %v1581, %v1595
    %v1598 = vlaneseq
    %v1599 = vshrl.u32 %v1598, 7
    %v1600 = vsub.s32 0, %v1599
    %v1601 = vrot.slane %v1571, %v1600
    %v1602 = vmul.f32 %v1596, %v1601
    %v1603 = vmul.f32 %v1597, %v1601
    %v1604 = vlaneseq
    %v1605 = vshrl.u32 %v1604, 7
    %v1606 = vsub.s32 1, %v1605
    %v1607 = vrot.slane %v1571, %v1606
    %v1608 = vadd.f32 %v1602, %v1607
    %v1609 = vadd.f32 %v1603, %v1607
    %1610 = vst.msk [vmem:[#allocation11] sm:$0xff] %vm209, %v1608
    %1611 = vst.msk [vmem:[#allocation11 + $0x8] sm:$0xff] %vm209, %v1609
    // Predicated region
    $region62: #{tpu_custom_call.1} parent=1 // pred_check
      _
    $region63: #{tpu_custom_call.1} parent=1 // pred_check_branch
      %1613 = sbr.rel (0) target = $region65
    $region64: #{tpu_custom_call.1} parent=1 // pred_region
      %s1615 = ssub.s32 256, 256
      %1616 = vsyncadd [#allocation4], %s1615
      %s1617 = sshll.u32 [#allocation11], 4
      %s1618 = int_to_ptr.vmem [resolvable:$true] %s1617
      %1623 = dma.vmem_to_hbm [thread:$0]  %s1618, 256, %s10, [#allocation4], 128, 128, 8
    $region65: #{tpu_custom_call.1} parent=1 // pred_fallthru
      _
    // Predicated region
    $region66: #{tpu_custom_call.1} parent=1 // pred_check
      _
    $region67: #{tpu_custom_call.1} parent=1 // pred_check_branch
      %1625 = sbr.rel (0) target = $region69
    $region68: #{tpu_custom_call.1} parent=1 // pred_region
      %1626 = dma.done [#allocation4], 256
    $region69: #{tpu_custom_call.1} parent=1 // pred_fallthru
      _
    %1627 = vsyncpa [#allocation3], 1
    %1628 = vsyncpa [#allocation6], 1
    %1629 = vsyncpa [#allocation9], 1
    %1630 = vsyncpa [#allocation4], 1

</llo_original>
